<compile_context>
chip_gen: v7x
topology: tpu7x:2x2x1
jax: 0.10.0
libtpu: 0.0.40
codegen_flags: <defaults>
</compile_context>

<pallas_src>
import functools

import jax
import jax.numpy as jnp
from jax.experimental import pallas as pl
from jax.experimental.pallas import tpu as pltpu

LANE = 128


def _round_up(n, m):
    return ((n + m - 1) // m) * m


def _offline_layer_kernel(x_ref, g_ref, bias_ref, gamma_ref, beta_ref, o_ref,
                          *, seg_len, stride, n_shifts, inv_cv, eps,
                          cov_true, cov_padded):
    """conv+graph matmul -> temporal shift-add -> LayerNorm -> ReLU -> residual."""
    # (1) fused 1x1-conv + graph mix (+ partition sum): one MXU matmul,
    #     M = Nb*L rows, K = C_in*V, N = C_out*V, f32 accumulation.  x and G are
    #     already in the compute dtype, so there is no in-kernel cast on this path.
    h = jnp.dot(x_ref[...], g_ref[...],
                preferred_element_type=jnp.float32) + bias_ref[...]

    # (2) temporal (toeplitz) mix as a banded shift-add.  Rows are
    #     (sample, frame) with frame innermost, so each term is a sublane roll
    #     (XLU) gated by a frame-boundary mask (VPU).  No (R, R) matmul.
    iota = jax.lax.broadcasted_iota(jnp.int32, h.shape, 0)
    if (seg_len & (seg_len - 1)) == 0:           # power-of-two segment length
        frame = iota & (seg_len - 1)
    else:
        frame = iota % seg_len
    z = h
    for i in range(1, n_shifts):
        s = i * stride
        z = z + jnp.where(frame >= s, pltpu.roll(h, shift=s, axis=0), 0.0)

    # (3) LayerNorm over (channel, joint) per frame == per row.  Lane reductions
    #     with a precomputed 1/(C*V) and rsqrt on the EUP.  Padded lanes (if
    #     any) carry exact zeros and are masked out of the variance.
    mu = jnp.sum(z, axis=-1, keepdims=True) * inv_cv
    d = z - mu
    if cov_padded:
        lane = jax.lax.broadcasted_iota(jnp.int32, d.shape, 1)
        d = jnp.where(lane < cov_true, d, 0.0)
    var = jnp.sum(d * d, axis=-1, keepdims=True) * inv_cv
    zn = d * jax.lax.rsqrt(var + eps) * gamma_ref[...] + beta_ref[...]
    zn = jnp.maximum(zn, 0.0)                    # ReLU of bn_relu

    # (4) identity residual (C_in == C_out, stride == 1) + final ReLU; dropout
    #     is identity.  x is re-read here instead of being held live across the
    #     matmul / LayerNorm to keep vreg pressure low.
    o_ref[...] = jnp.maximum(
        zn + x_ref[...].astype(jnp.float32), 0.0).astype(o_ref.dtype)


def make_toeplitz(L, kernel_size, stride):
    """Matches the torch construction: sum_i pad(eye(L - stride*i))."""
    T = jnp.zeros((L, L), jnp.float32)
    for i in range(kernel_size // stride):
        eye = jnp.eye(L - stride * i, dtype=jnp.float32)
        T = T + jnp.pad(eye, ((0, stride * i), (stride * i, 0)))
    return T


def _choose_batch_block(N, L, target_rows=256):
    """Largest Nb dividing N with Nb*L <= target_rows, while keeping >= 2 grid
    steps when N > 1 (both v7x TensorCores busy; harmless on 1-TC chips)."""
    cap = min(N if N == 1 else N // 2, max(1, target_rows // L))
    nb = max(1, cap)
    while N % nb:
        nb -= 1
    return nb


def offline_layer(x, conv_w, conv_b, A, edge_importance, gamma, beta, *,
                  kernel_size, stride=1, eps=1e-5,
                  compute_dtype=jnp.bfloat16, out_dtype=None,
                  batch_block=None, target_rows=256):
    N, C_in, L, V = x.shape
    P = A.shape[0]
    C_out = gamma.shape[0]
    assert C_in == C_out and stride == 1, \
        "identity residual path requires in_channels == out_channels, stride == 1"
    if out_dtype is None:
        out_dtype = compute_dtype
    f32 = jnp.float32

    Nb = batch_block if batch_block is not None else _choose_batch_block(
        N, L, target_rows)
    assert N % Nb == 0
    R = Nb * L                                   # rows per grid step (MXU M dim)
    CIV, COV = C_in * V, C_out * V
    CIVp, COVp = _round_up(CIV, LANE), _round_up(COV, LANE)
    assert CIVp == COVp                          # identity residual alignment
    assert R % 8 == 0 or Nb == N, "row block must be a multiple of 8 sublanes"

    # ---- small, grid-invariant operands (no (L*V)^2 kron, no (R,R) toeplitz) ----
    M = (A * edge_importance).astype(f32)                        # (P, V, V)
    W = conv_w.reshape(P, C_out, C_in).astype(f32)               # (P, C_out, C_in)
    b = conv_b.reshape(P, C_out).astype(f32)

    # Fused 1x1-conv + graph-mix operator, its graph-mixed bias, and the
    # LayerNorm affine rows; all zero-padded to lane-dense (128-multiple) width.
    G = jnp.einsum('pci,puv->iucv', W, M).reshape(CIV, COV)      # (C_in*V, C_out*V)
    bias_gv = jnp.einsum('pc,pv->cv', b, M.sum(axis=1)).reshape(1, COV)
    Gp = jnp.pad(G, ((0, CIVp - CIV), (0, COVp - COV))).astype(compute_dtype)
    bias_p = jnp.pad(bias_gv, ((0, 0), (0, COVp - COV)))
    gamma_p = jnp.pad(gamma.astype(f32).reshape(1, COV), ((0, 0), (0, COVp - COV)))
    beta_p = jnp.pad(beta.astype(f32).reshape(1, COV), ((0, 0), (0, COVp - COV)))

    # rows = (sample, frame), lanes = (channel, joint); shipped in compute dtype
    # (bf16 halves input HBM traffic; the residual add is done in f32 in-kernel).
    x2 = jnp.transpose(x, (0, 2, 1, 3)).reshape(N * L, CIV)
    x2 = jnp.pad(x2, ((0, 0), (0, CIVp - CIV))).astype(compute_dtype)

    kernel = functools.partial(
        _offline_layer_kernel,
        seg_len=L, stride=stride, n_shifts=kernel_size // stride,
        inv_cv=1.0 / float(COV), eps=float(eps),
        cov_true=COV, cov_padded=(COVp != COV))

    # Chip-aware VMEM budget: double-buffered x/out blocks, invariant operands,
    # and f32 temporary headroom; ceiling derived from the actual chip's VMEM
    # (64 MiB v7x-safe fallback) rather than a hard 32 MiB clamp.
    itemsize = lambda dt: jnp.dtype(dt).itemsize
    vmem_need = (2 * itemsize(compute_dtype) * R * CIVp
                 + 2 * itemsize(out_dtype) * R * COVp
                 + 2 * itemsize(compute_dtype) * CIVp * COVp
                 + 2 * 3 * 4 * COVp
                 + 6 * 4 * R * COVp)
    try:
        vmem_cap = int(getattr(pltpu.get_tpu_info(), "vmem_capacity_bytes",
                               64 << 20))
    except Exception:
        vmem_cap = 64 << 20
    vmem_limit = int(min(max(2 * vmem_need, 16 << 20), (vmem_cap * 3) // 4))

    # NOTE: G / bias / gamma / beta are grid-invariant (< 100 KiB here).  At
    # large C*V they should be single-buffered (pipeline_mode=pl.Buffered(1))
    # and G tiled over an output-lane grid axis to fit v7x's 64 MiB VMEM.
    grid_spec = pltpu.PrefetchScalarGridSpec(
        num_scalar_prefetch=0,
        grid=(N // Nb,),
        in_specs=[
            pl.BlockSpec((R, CIVp), lambda i: (i, 0)),     # x rows for this block
            pl.BlockSpec((CIVp, COVp), lambda i: (0, 0)),  # fused conv+graph operator
            pl.BlockSpec((1, COVp), lambda i: (0, 0)),     # graph-mixed conv bias
            pl.BlockSpec((1, COVp), lambda i: (0, 0)),     # LayerNorm gamma
            pl.BlockSpec((1, COVp), lambda i: (0, 0)),     # LayerNorm beta
        ],
        out_specs=pl.BlockSpec((R, COVp), lambda i: (i, 0)),
    )

    out2 = pl.pallas_call(
        kernel,
        out_shape=jax.ShapeDtypeStruct((N * L, COVp), out_dtype),
        grid_spec=grid_spec,
        compiler_params=pltpu.CompilerParams(
            dimension_semantics=("parallel",),
            vmem_limit_bytes=vmem_limit),
    )(x2, Gp, bias_p, gamma_p, beta_p)

    if COVp != COV:
        out2 = out2[:, :COV]
    return jnp.transpose(out2.reshape(N, L, C_out, V), (0, 2, 1, 3))


def reference(x, conv_w, conv_b, A, E, T, gamma, beta, eps=1e-5):
    """Pure-JAX transcription of the PyTorch forward (for validation)."""
    N, C_in, L, V = x.shape
    P = A.shape[0]
    C_out = gamma.shape[0]
    W = conv_w.reshape(P * C_out, C_in)
    h = jnp.einsum('oc,nclv->nolv', W, x) + conv_b[None, :, None, None]
    h = h.reshape(N, P, C_out, L, V)          # split(dim=1) + stack(-1) (+ permute)
    y = jnp.transpose(h, (0, 3, 1, 2, 4))     # (N, L, P, C, V)
    y = jnp.einsum('nlpcu,puv->nlpcv', y, A * E)
    y = jnp.transpose(y, (0, 2, 3, 4, 1))     # (N, P, C, V, L)
    y = jnp.einsum('npcvl,lm->npcvm', y, T)
    y = jnp.sum(y, axis=1)                    # (N, C, V, L)
    y = jnp.transpose(y, (0, 1, 3, 2))        # (N, C, L, V)
    mu = jnp.mean(y, axis=(1, 3), keepdims=True)
    var = jnp.mean((y - mu) ** 2, axis=(1, 3), keepdims=True)
    yn = (y - mu) / jnp.sqrt(var + eps)
    yn = yn * gamma[None, :, None, :] + beta[None, :, None, :]
    yn = jnp.maximum(yn, 0.0)
    return jnp.maximum(yn + x, 0.0)


if __name__ == "__main__":
    # Small shapes: batch=32 (16 samples per grid step -> R=256 MXU rows, 2 grid
    # steps), channels(in=out)=8, segment L=16, joints V=16 (C*V = 128 lanes),
    # partitions P=3, temporal kernel=3, stride=1.
    N, C, L, V, P, KSIZE, STRIDE = 32, 8, 16, 16, 3, 3, 1

    key = jax.random.PRNGKey(0)
    k1, k2, k3, k4, k5, k6, k7 = jax.random.split(key, 7)
    x = jax.random.normal(k1, (N, C, L, V), jnp.float32)
    conv_w = 0.1 * jax.random.normal(k2, (C * P, C, 1, 1), jnp.float32)
    conv_b = 0.1 * jax.random.normal(k3, (C * P,), jnp.float32)
    A = jax.random.uniform(k4, (P, V, V), jnp.float32) / V           # adjacency
    # Perturb edge_importance / LayerNorm affine away from their init values so
    # every multiplicative path is actually exercised by the check.
    E = 1.0 + 0.1 * jax.random.normal(k5, (P, V, V), jnp.float32)    # edge_importance
    T = make_toeplitz(L, KSIZE, STRIDE)                              # toeplitz buffer
    gamma = 1.0 + 0.1 * jax.random.normal(k6, (C, V), jnp.float32)   # LayerNorm weight
    beta = 0.1 * jax.random.normal(k7, (C, V), jnp.float32)          # LayerNorm bias

    ref = reference(x, conv_w, conv_b, A, E, T, gamma, beta)

    # Exact-math path (all-f32 operands and f32 output): tight tolerance.
    out_f32 = jax.block_until_ready(
        offline_layer(x, conv_w, conv_b, A, E, gamma, beta,
                      kernel_size=KSIZE, stride=STRIDE,
                      compute_dtype=jnp.float32, out_dtype=jnp.float32))
    assert out_f32.shape == (N, C, L, V)
    err_f32 = float(jnp.max(jnp.abs(out_f32 - ref)))
    assert err_f32 < 1e-3, f"f32 max abs err {err_f32}"

    # bf16 MXU operands, bf16 input/output HBM traffic, f32 accumulation /
    # LayerNorm / residual inside the kernel.
    out_bf16 = jax.block_until_ready(
        offline_layer(x, conv_w, conv_b, A, E, gamma, beta,
                      kernel_size=KSIZE, stride=STRIDE,
                      compute_dtype=jnp.bfloat16))
    ok = bool(jnp.all(jnp.abs(out_bf16.astype(jnp.float32) - ref)
                      <= 2e-2 + 2e-2 * jnp.abs(ref)))
    assert ok, "bf16 kernel outside tolerance vs f32 reference"

    print("KERNEL_OK")
</pallas_src>

<mosaic_0001>
module attributes {stable_mosaic.version = 11 : i64} {
  func.func @_offline_layer_kernel(%arg0: i32, %arg1: memref<256x128xf32, #tpu.memory_space<vmem>>, %arg2: memref<128x128xf32, #tpu.memory_space<vmem>>, %arg3: memref<1x128xf32, #tpu.memory_space<vmem>>, %arg4: memref<1x128xf32, #tpu.memory_space<vmem>>, %arg5: memref<1x128xf32, #tpu.memory_space<vmem>>, %arg6: memref<256x128xf32, #tpu.memory_space<vmem>>) attributes {dimension_semantics = [#tpu.dimension_semantics<parallel>], iteration_bounds = array<i64: 2>, scalar_prefetch = 0 : i64, scratch_operands = 0 : i64, tpu.core_type = #tpu.core_type<tc>, window_params = [{transform_indices = @transform_0, window_bounds = array<i64: 256, 128>}, {pipeline_mode = #tpu.pipeline_mode<synchronous>, transform_indices = @transform_1, window_bounds = array<i64: 128, 128>}, {pipeline_mode = #tpu.pipeline_mode<synchronous>, transform_indices = @transform_2, window_bounds = array<i64: 1, 128>}, {pipeline_mode = #tpu.pipeline_mode<synchronous>, transform_indices = @transform_3, window_bounds = array<i64: 1, 128>}, {pipeline_mode = #tpu.pipeline_mode<synchronous>, transform_indices = @transform_4, window_bounds = array<i64: 1, 128>}, {transform_indices = @transform_5, window_bounds = array<i64: 256, 128>}]} {
    %c0 = arith.constant 0 : index
    %c0_0 = arith.constant 0 : index
    %0 = vector.load %arg1[%c0, %c0_0] : memref<256x128xf32, #tpu.memory_space<vmem>>, vector<256x128xf32>
    %c0_1 = arith.constant 0 : index
    %c0_2 = arith.constant 0 : index
    %1 = vector.load %arg2[%c0_1, %c0_2] : memref<128x128xf32, #tpu.memory_space<vmem>>, vector<128x128xf32>
    %cst = arith.constant dense<0.000000e+00> : vector<256x128xf32>
    %2 = tpu.matmul %0, %1, %cst {dimension_numbers = #tpu.dot_dimension_numbers<[1], [0], [0], [1], [0, 0, 1, 1], [], []>} : vector<256x128xf32>, vector<128x128xf32>, vector<256x128xf32> -> vector<256x128xf32>
    %c0_3 = arith.constant 0 : index
    %c0_4 = arith.constant 0 : index
    %3 = vector.load %arg3[%c0_3, %c0_4] : memref<1x128xf32, #tpu.memory_space<vmem>>, vector<1x128xf32>
    %4 = vector.broadcast %3 : vector<1x128xf32> to vector<256x128xf32>
    %5 = arith.addf %2, %4 : vector<256x128xf32>
    %6 = tpu.iota {dimensions = array<i32: 0>} : vector<256x128xi32>
    %c15_i32 = arith.constant 15 : i32
    %7 = vector.broadcast %c15_i32 : i32 to vector<256x128xi32>
    %8 = arith.andi %6, %7 : vector<256x128xi32>
    %c1_i32 = arith.constant 1 : i32
    %9 = vector.broadcast %c1_i32 : i32 to vector<256x128xi32>
    %10 = arith.cmpi sge, %8, %9 : vector<256x128xi32>
    %c1_i32_5 = arith.constant 1 : i32
    %11 = tpu.dynamic_rotate %5 by %c1_i32_5 dim 0 : vector<256x128xf32>, i32 -> vector<256x128xf32>
    %cst_6 = arith.constant 0.000000e+00 : f32
    %12 = vector.broadcast %cst_6 : f32 to vector<256x128xf32>
    %13 = arith.select %10, %11, %12 : vector<256x128xi1>, vector<256x128xf32>
    %14 = arith.addf %5, %13 : vector<256x128xf32>
    %c2_i32 = arith.constant 2 : i32
    %15 = vector.broadcast %c2_i32 : i32 to vector<256x128xi32>
    %16 = arith.cmpi sge, %8, %15 : vector<256x128xi32>
    %c2_i32_7 = arith.constant 2 : i32
    %17 = tpu.dynamic_rotate %5 by %c2_i32_7 dim 0 : vector<256x128xf32>, i32 -> vector<256x128xf32>
    %cst_8 = arith.constant 0.000000e+00 : f32
    %18 = vector.broadcast %cst_8 : f32 to vector<256x128xf32>
    %19 = arith.select %16, %17, %18 : vector<256x128xi1>, vector<256x128xf32>
    %20 = arith.addf %14, %19 : vector<256x128xf32>
    %cst_9 = arith.constant dense<0.000000e+00> : vector<256xf32>
    %21 = vector.multi_reduction <add>, %20, %cst_9 [1] : vector<256x128xf32> to vector<256xf32>
    %22 = vector.shape_cast %21 : vector<256xf32> to vector<256x1xf32>
    %cst_10 = arith.constant 7.812500e-03 : f32
    %23 = vector.broadcast %cst_10 : f32 to vector<256x1xf32>
    %24 = arith.mulf %22, %23 : vector<256x1xf32>
    %25 = vector.broadcast %24 : vector<256x1xf32> to vector<256x128xf32>
    %26 = arith.subf %20, %25 : vector<256x128xf32>
    %27 = arith.mulf %26, %26 : vector<256x128xf32>
    %cst_11 = arith.constant dense<0.000000e+00> : vector<256xf32>
    %28 = vector.multi_reduction <add>, %27, %cst_11 [1] : vector<256x128xf32> to vector<256xf32>
    %29 = vector.shape_cast %28 : vector<256xf32> to vector<256x1xf32>
    %cst_12 = arith.constant 7.812500e-03 : f32
    %30 = vector.broadcast %cst_12 : f32 to vector<256x1xf32>
    %31 = arith.mulf %29, %30 : vector<256x1xf32>
    %cst_13 = arith.constant 9.99999974E-6 : f32
    %32 = vector.broadcast %cst_13 : f32 to vector<256x1xf32>
    %33 = arith.addf %31, %32 : vector<256x1xf32>
    %34 = math.rsqrt %33 : vector<256x1xf32>
    %35 = vector.broadcast %34 : vector<256x1xf32> to vector<256x128xf32>
    %36 = arith.mulf %26, %35 : vector<256x128xf32>
    %c0_14 = arith.constant 0 : index
    %c0_15 = arith.constant 0 : index
    %37 = vector.load %arg4[%c0_14, %c0_15] : memref<1x128xf32, #tpu.memory_space<vmem>>, vector<1x128xf32>
    %38 = vector.broadcast %37 : vector<1x128xf32> to vector<256x128xf32>
    %39 = arith.mulf %36, %38 : vector<256x128xf32>
    %c0_16 = arith.constant 0 : index
    %c0_17 = arith.constant 0 : index
    %40 = vector.load %arg5[%c0_16, %c0_17] : memref<1x128xf32, #tpu.memory_space<vmem>>, vector<1x128xf32>
    %41 = vector.broadcast %40 : vector<1x128xf32> to vector<256x128xf32>
    %42 = arith.addf %39, %41 : vector<256x128xf32>
    %cst_18 = arith.constant 0.000000e+00 : f32
    %43 = vector.broadcast %cst_18 : f32 to vector<256x128xf32>
    %44 = arith.maximumf %42, %43 : vector<256x128xf32>
    %c0_19 = arith.constant 0 : index
    %c0_20 = arith.constant 0 : index
    %45 = vector.load %arg1[%c0_19, %c0_20] : memref<256x128xf32, #tpu.memory_space<vmem>>, vector<256x128xf32>
    %46 = arith.addf %44, %45 : vector<256x128xf32>
    %cst_21 = arith.constant 0.000000e+00 : f32
    %47 = vector.broadcast %cst_21 : f32 to vector<256x128xf32>
    %48 = arith.maximumf %46, %47 : vector<256x128xf32>
    %c0_22 = arith.constant 0 : index
    %c0_23 = arith.constant 0 : index
    %49 = vector.load %arg6[%c0_22, %c0_23] : memref<256x128xf32, #tpu.memory_space<vmem>>, vector<256x128xf32>
    tpu.vector_store %arg6[%c0_22, %c0_23], %48 {strides = array<i32>} : memref<256x128xf32, #tpu.memory_space<vmem>>, vector<256x128xf32>,
    return
  }
  func.func @transform_0(%arg0: i32) -> (i32, i32) {
    %c0_i32 = arith.constant 0 : i32
    %c0_i32_0 = arith.constant 0 : i32
    return %arg0, %c0_i32 : i32, i32
  }
  func.func @transform_1(%arg0: i32) -> (i32, i32) {
    %c0_i32 = arith.constant 0 : i32
    %c0_i32_0 = arith.constant 0 : i32
    %c0_i32_1 = arith.constant 0 : i32
    return %c0_i32, %c0_i32_0 : i32, i32
  }
  func.func @transform_2(%arg0: i32) -> (i32, i32) {
    %c0_i32 = arith.constant 0 : i32
    %c0_i32_0 = arith.constant 0 : i32
    %c0_i32_1 = arith.constant 0 : i32
    return %c0_i32, %c0_i32_0 : i32, i32
  }
  func.func @transform_3(%arg0: i32) -> (i32, i32) {
    %c0_i32 = arith.constant 0 : i32
    %c0_i32_0 = arith.constant 0 : i32
    %c0_i32_1 = arith.constant 0 : i32
    return %c0_i32, %c0_i32_0 : i32, i32
  }
  func.func @transform_4(%arg0: i32) -> (i32, i32) {
    %c0_i32 = arith.constant 0 : i32
    %c0_i32_0 = arith.constant 0 : i32
    %c0_i32_1 = arith.constant 0 : i32
    return %c0_i32, %c0_i32_0 : i32, i32
  }
  func.func @transform_5(%arg0: i32) -> (i32, i32) {
    %c0_i32 = arith.constant 0 : i32
    %c0_i32_0 = arith.constant 0 : i32
    return %arg0, %c0_i32 : i32, i32
  }
}

</mosaic_0001>

<llo_original>
// kernel: tpu_custom_call.1
$region0: #{tpu_custom_call.1}
  #allocation0 [shape = 'u32[]', space=smem, size = 0x4, offset = 0x4, fixed_abs, tag = 'smem constant byte address 0x4 - core index']
  #allocation1 [shape = 'u32[144,128]{1,0:T(1,128)}', space=vmem, size = 0x12000, scoped, tag = 'internal scratch']
  %s0 = inlined_call_operand.hbm [shape: f32[512,128], index: 0, kind: input, shape index: {}]
  %s1 = inlined_call_operand.hbm [shape: f32[128,128], index: 1, kind: input, shape index: {}]
  %s2 = inlined_call_operand.vmem [shape: f32[1,128], index: 2, kind: input, shape index: {}]
  %s3 = inlined_call_operand.vmem [shape: f32[1,128], index: 3, kind: input, shape index: {}]
  %s4 = inlined_call_operand.vmem [shape: f32[1,128], index: 4, kind: input, shape index: {}]
  %s5 = inlined_call_operand.hbm [shape: f32[512,128], index: 5, kind: output, shape index: {}]
  %s6 = sld [smem:[#allocation0]]
  $region61: #{tpu_custom_call.1} parent=0
    _
  %s8 = ssub.s32 1, %s6
  %s9 = scalar_select 0, %s8, %s6
  $region1: #{tpu_custom_call.1} parent=0
    #allocation2 [shape = 'u8[262144]{0}', space=vmem, size = 0x40000, scoped, tag = 'input window, operand 0']
    #allocation3 [shape = 's32[2]{0}', space=sflag, size = 0x8, scoped, tag = 'scoped memory for tpu_custom_call.1']
    #allocation4 [shape = 's32[2]{0}', space=sflag, size = 0x8, scoped, tag = 'scoped memory for tpu_custom_call.1']
    #allocation5 [shape = 'u8[65536]{0}', space=vmem, size = 0x10000, scoped, tag = 'input window, operand 1, single buffered']
    #allocation6 [shape = 's32[1]{0}', space=sflag, size = 0x4, scoped, tag = 'scoped memory for tpu_custom_call.1']
    #allocation7 [shape = 'u8[262144]{0}', space=vmem, size = 0x40000, scoped, tag = 'output window, operand 0']
    %10 = vsyncpa [#allocation3], 0
    %s11 = scalar_lea.sflag [#allocation3], 1
    %12 = vsyncpa %s11, 0
    %13 = vsyncpa [#allocation6], 0
    %14 = vsyncpa [#allocation4], 0
    %s15 = scalar_lea.sflag [#allocation4], 1
    %16 = vsyncpa %s15, 0
    loop: start=0, step=1, limit=4
    $region2: #{tpu_custom_call.1} parent=1 // loop_pre_header
      _
    $region3: #{tpu_custom_call.1} parent=1 // loop_header
      %s18 = sphi 0, %s22
      %p19 = scmp.ge.s32.totalorder %s18, 4
      %s28 = sphi 0, %s30
      %s31 = sphi 0, %s28
      %s32 = sphi 0, %s31
      %s48 = sphi 0, %s32
      %s52 = sphi 0, %s52
      %s54 = sphi 0, %s52
      %s55 = sphi 0, %s54
      %s69 = sphi 0, %s55
      %s73 = sphi 0, %s73
      %s75 = sphi 0, %s73
      %s76 = sphi 0, %s75
      %s90 = sphi 0, %s76
      %s94 = sphi 0, %s94
      %s96 = sphi 0, %s94
      %s97 = sphi 0, %s96
      %s111 = sphi 0, %s97
      %s115 = sphi 0, %s115
      %s117 = sphi 0, %s115
      %s118 = sphi 0, %s117
      %s132 = sphi 0, %s118
      %s138 = sphi 0, %s140
      %s141 = sphi 0, %s138
      %s142 = sphi 0, %s141
      %s158 = sphi 0, %s142
    $region4: #{tpu_custom_call.1} parent=1 // loop_header_branch
      %21 = sbr.rel (%p19) target = $region8
    $region5: #{tpu_custom_call.1} parent=1 // loop_body
      %s23 = ssub.s32 %s18, 1
      %s24 = ssub.s32 %s18, 2
      %s25 = sadd.s32 %s18, 1
      %s26 = ssub.s32 %s18, %s25
      %p27 = scmp.eq.s32.totalorder %s26, 0
      %s29 = sadd.s32 %s28, 1
      %s30 = scalar_select %p27, %s28, %s29
      %p33 = pneg %p27
      %p34 = scmp.eq.s32.totalorder %s18, 1
      %p35 = por %p33, %p34
      %p36 = scmp.ne.s32.totalorder %s28, %s31
      %p37 = scmp.eq.s32.totalorder %s18, 0
      %p38 = por %p36, %p37
      %p39 = scmp.ne.s32.totalorder %s28, %s31
      %p40 = scmp.eq.s32.totalorder %s23, 1
      %p41 = por %p39, %p40
      %p42 = scmp.ne.s32.totalorder %s31, %s32
      %p43 = scmp.eq.s32.totalorder %s23, 0
      %p44 = por %p42, %p43
      %p45 = scmp.ne.s32.totalorder %s31, %s32
      %p46 = scmp.eq.s32.totalorder %s24, 1
      %p47 = por %p45, %p46
      %p49 = scmp.ne.s32.totalorder %s32, %s48
      %p50 = scmp.eq.s32.totalorder %s24, 0
      %p51 = por %p49, %p50
      %s53 = sadd.s32 %s52, 1
      %p56 = scmp.eq.s32.totalorder %s18, 1
      %p57 = scmp.ne.s32.totalorder %s52, %s54
      %p58 = scmp.eq.s32.totalorder %s18, 0
      %p59 = por %p57, %p58
      %p60 = scmp.ne.s32.totalorder %s52, %s54
      %p61 = scmp.eq.s32.totalorder %s23, 1
      %p62 = por %p60, %p61
      %p63 = scmp.ne.s32.totalorder %s54, %s55
      %p64 = scmp.eq.s32.totalorder %s23, 0
      %p65 = por %p63, %p64
      %p66 = scmp.ne.s32.totalorder %s54, %s55
      %p67 = scmp.eq.s32.totalorder %s24, 1
      %p68 = por %p66, %p67
      %p70 = scmp.ne.s32.totalorder %s55, %s69
      %p71 = scmp.eq.s32.totalorder %s24, 0
      %p72 = por %p70, %p71
      %s74 = sadd.s32 %s73, 1
      %p77 = scmp.eq.s32.totalorder %s18, 1
      %p78 = scmp.ne.s32.totalorder %s73, %s75
      %p79 = scmp.eq.s32.totalorder %s18, 0
      %p80 = por %p78, %p79
      %p81 = scmp.ne.s32.totalorder %s73, %s75
      %p82 = scmp.eq.s32.totalorder %s23, 1
      %p83 = por %p81, %p82
      %p84 = scmp.ne.s32.totalorder %s75, %s76
      %p85 = scmp.eq.s32.totalorder %s23, 0
      %p86 = por %p84, %p85
      %p87 = scmp.ne.s32.totalorder %s75, %s76
      %p88 = scmp.eq.s32.totalorder %s24, 1
      %p89 = por %p87, %p88
      %p91 = scmp.ne.s32.totalorder %s76, %s90
      %p92 = scmp.eq.s32.totalorder %s24, 0
      %p93 = por %p91, %p92
      %s95 = sadd.s32 %s94, 1
      %p98 = scmp.eq.s32.totalorder %s18, 1
      %p99 = scmp.ne.s32.totalorder %s94, %s96
      %p100 = scmp.eq.s32.totalorder %s18, 0
      %p101 = por %p99, %p100
      %p102 = scmp.ne.s32.totalorder %s94, %s96
      %p103 = scmp.eq.s32.totalorder %s23, 1
      %p104 = por %p102, %p103
      %p105 = scmp.ne.s32.totalorder %s96, %s97
      %p106 = scmp.eq.s32.totalorder %s23, 0
      %p107 = por %p105, %p106
      %p108 = scmp.ne.s32.totalorder %s96, %s97
      %p109 = scmp.eq.s32.totalorder %s24, 1
      %p110 = por %p108, %p109
      %p112 = scmp.ne.s32.totalorder %s97, %s111
      %p113 = scmp.eq.s32.totalorder %s24, 0
      %p114 = por %p112, %p113
      %s116 = sadd.s32 %s115, 1
      %p119 = scmp.eq.s32.totalorder %s18, 1
      %p120 = scmp.ne.s32.totalorder %s115, %s117
      %p121 = scmp.eq.s32.totalorder %s18, 0
      %p122 = por %p120, %p121
      %p123 = scmp.ne.s32.totalorder %s115, %s117
      %p124 = scmp.eq.s32.totalorder %s23, 1
      %p125 = por %p123, %p124
      %p126 = scmp.ne.s32.totalorder %s117, %s118
      %p127 = scmp.eq.s32.totalorder %s23, 0
      %p128 = por %p126, %p127
      %p129 = scmp.ne.s32.totalorder %s117, %s118
      %p130 = scmp.eq.s32.totalorder %s24, 1
      %p131 = por %p129, %p130
      %p133 = scmp.ne.s32.totalorder %s118, %s132
      %p134 = scmp.eq.s32.totalorder %s24, 0
      %p135 = por %p133, %p134
      %s136 = ssub.s32 %s18, %s25
      %p137 = scmp.eq.s32.totalorder %s136, 0
      %s139 = sadd.s32 %s138, 1
      %s140 = scalar_select %p137, %s138, %s139
      %p143 = pneg %p137
      %p144 = scmp.eq.s32.totalorder %s18, 1
      %p145 = por %p143, %p144
      %p146 = scmp.ne.s32.totalorder %s138, %s141
      %p147 = scmp.eq.s32.totalorder %s18, 0
      %p148 = por %p146, %p147
      %p149 = scmp.ne.s32.totalorder %s138, %s141
      %p150 = scmp.eq.s32.totalorder %s23, 1
      %p151 = por %p149, %p150
      %p152 = scmp.ne.s32.totalorder %s141, %s142
      %p153 = scmp.eq.s32.totalorder %s23, 0
      %p154 = por %p152, %p153
      %p155 = scmp.ne.s32.totalorder %s141, %s142
      %p156 = scmp.eq.s32.totalorder %s24, 1
      %p157 = por %p155, %p156
      %p159 = scmp.ne.s32.totalorder %s142, %s158
      %p160 = scmp.eq.s32.totalorder %s24, 0
      %p161 = por %p159, %p160
      %p162 = scmp.le.s32.totalorder 1, %s18
      %p163 = scmp.lt.s32.totalorder %s18, 3
      %p164 = pnand %p162, %p163
      %p165 = pneg %p164
      // Predicated region
      $region9: #{tpu_custom_call.1} parent=5 // pred_check
        _
      $region10: #{tpu_custom_call.1} parent=5 // pred_check_branch
        %167 = sbr.rel (%p164) target = $region12
      $region11: #{tpu_custom_call.1} parent=5 // pred_region
        %s168 = ssub.s32 %s18, 1
        // Predicated region
        $region13: #{tpu_custom_call.1} parent=11 // pred_check
          %p169 = pneg %p65
        $region14: #{tpu_custom_call.1} parent=11 // pred_check_branch
          %171 = sbr.rel (%p169) target = $region16
        $region15: #{tpu_custom_call.1} parent=11 // pred_region
          %s173 = ssub.s32 2048, 2048
          %174 = vsyncadd [#allocation6], %s173
          %s175 = sshll.u32 [#allocation5], 4
          %s176 = int_to_ptr.vmem [resolvable:$true] %s175
          %181 = dma.hbm_to_vmem [thread:$0]  %s1, 2048, %s176, [#allocation6], 128, 128, 8
        $region16: #{tpu_custom_call.1} parent=11 // pred_fallthru
          _
        // Predicated region
        $region17: #{tpu_custom_call.1} parent=11 // pred_check
          %p182 = pneg %p86
        $region18: #{tpu_custom_call.1} parent=11 // pred_check_branch
          %184 = sbr.rel (%p182) target = $region20
        $region19: #{tpu_custom_call.1} parent=11 // pred_region
          _
        $region20: #{tpu_custom_call.1} parent=11 // pred_fallthru
          _
        // Predicated region
        $region21: #{tpu_custom_call.1} parent=11 // pred_check
          %p185 = pneg %p107
        $region22: #{tpu_custom_call.1} parent=11 // pred_check_branch
          %187 = sbr.rel (%p185) target = $region24
        $region23: #{tpu_custom_call.1} parent=11 // pred_region
          _
        $region24: #{tpu_custom_call.1} parent=11 // pred_fallthru
          _
        // Predicated region
        $region25: #{tpu_custom_call.1} parent=11 // pred_check
          %p188 = pneg %p128
        $region26: #{tpu_custom_call.1} parent=11 // pred_check_branch
          %190 = sbr.rel (%p188) target = $region28
        $region27: #{tpu_custom_call.1} parent=11 // pred_region
          _
        $region28: #{tpu_custom_call.1} parent=11 // pred_fallthru
          _
      $region12: #{tpu_custom_call.1} parent=5 // pred_fallthru
        _
      %p191 = scmp.lt.s32.totalorder %s18, 2
      // Predicated region
      $region29: #{tpu_custom_call.1} parent=5 // pred_check
        %p192 = pneg %p191
      $region30: #{tpu_custom_call.1} parent=5 // pred_check_branch
        %194 = sbr.rel (%p192) target = $region32
      $region31: #{tpu_custom_call.1} parent=5 // pred_region
        // Predicated region
        $region33: #{tpu_custom_call.1} parent=31 // pred_check
          %p195 = pneg %p38
        $region34: #{tpu_custom_call.1} parent=31 // pred_check_branch
          %197 = sbr.rel (%p195) target = $region36
        $region35: #{tpu_custom_call.1} parent=31 // pred_region
          %s198 = sand.u32 %s28, 1
          %s199 = scalar_lea.sflag [#allocation3], %s198
          %s200 = sand.u32 %s28, 1
          %s201 = smul.addr %s200, 256
          %s202 = scalar_lea.vmem [#allocation2], %s201
          %s203 = smul.u32 32, %s18
          %s205 = ssub.s32 4096, 4096
          %206 = vsyncadd %s199, %s205
          %s207 = smul.addr %s203, 128
          %s208 = scalar_lea.hbm %s0, %s207
          %s209 = sshll.u32 %s202, 4
          %s210 = int_to_ptr.vmem [resolvable:$true] %s209
          %215 = dma.hbm_to_vmem [thread:$0]  %s208, 4096, %s210, %s199, 128, 128, 8
        $region36: #{tpu_custom_call.1} parent=31 // pred_fallthru
          _
      $region32: #{tpu_custom_call.1} parent=5 // pred_fallthru
        _
      %p216 = scmp.le.s32.totalorder 1, %s18
      %p217 = scmp.lt.s32.totalorder %s18, 3
      %p218 = pnand %p216, %p217
      %p219 = pneg %p218
      // Predicated region
      $region37: #{tpu_custom_call.1} parent=5 // pred_check
        _
      $region38: #{tpu_custom_call.1} parent=5 // pred_check_branch
        %221 = sbr.rel (%p218) target = $region40
      $region39: #{tpu_custom_call.1} parent=5 // pred_region
        %s222 = ssub.s32 %s18, 1
        %s223 = sand.u32 %s31, 1
        %s224 = scalar_lea.sflag [#allocation3], %s223
        %s225 = sand.u32 %s31, 1
        %s226 = smul.addr %s225, 256
        %s227 = scalar_lea.vmem [#allocation2], %s226
        // Predicated region
        $region41: #{tpu_custom_call.1} parent=39 // pred_check
          %p228 = pneg %p44
        $region42: #{tpu_custom_call.1} parent=39 // pred_check_branch
          %230 = sbr.rel (%p228) target = $region44
        $region43: #{tpu_custom_call.1} parent=39 // pred_region
          %231 = dma.done %s224, 4096
        $region44: #{tpu_custom_call.1} parent=39 // pred_fallthru
          _
        // Predicated region
        $region45: #{tpu_custom_call.1} parent=39 // pred_check
          %p232 = pneg %p65
        $region46: #{tpu_custom_call.1} parent=39 // pred_check_branch
          %234 = sbr.rel (%p232) target = $region48
        $region47: #{tpu_custom_call.1} parent=39 // pred_region
          %235 = dma.done [#allocation6], 2048
        $region48: #{tpu_custom_call.1} parent=39 // pred_fallthru
          _
        %s236 = sand.u32 %s31, 1
        %s237 = scalar_lea.sflag [#allocation3], %s236
        %s238 = sand.u32 %s31, 1
        %s239 = smul.addr %s238, 256
        %s240 = scalar_lea.vmem [#allocation2], %s239
        %p241 = pneg %p44
        %p242 = pneg %p41
        %p243 = pneg %p65
        %p244 = pneg %p62
        %p245 = pneg %p86
        %p246 = pneg %p83
        %p247 = pneg %p107
        %p248 = pneg %p104
        %p249 = pneg %p128
        %p250 = pneg %p125
        %p251 = pneg %p154
        %p252 = pneg %p151
        %s253 = sand.u32 %s141, 1
        %s254 = scalar_lea.sflag [#allocation4], %s253
        %s255 = sand.u32 %s141, 1
        %s256 = smul.addr %s255, 256
        %s257 = scalar_lea.vmem [#allocation7], %s256
        %s258 = smul.u32 32, %s23
        %s259 = smul.u32 32, %s23
        %v260 = vld [vmem:[%s227] sm:$0xff]
        %v261 = vld [vmem:[%s227 + $0x8] sm:$0xff]
        %v262 = vld [vmem:[%s227 + $0x10] sm:$0xff]
        %v263 = vld [vmem:[%s227 + $0x18] sm:$0xff]
        %v264 = vld [vmem:[%s227 + $0x20] sm:$0xff]
        %v265 = vld [vmem:[%s227 + $0x28] sm:$0xff]
        %v266 = vld [vmem:[%s227 + $0x30] sm:$0xff]
        %v267 = vld [vmem:[%s227 + $0x38] sm:$0xff]
        %v268 = vld [vmem:[%s227 + $0x40] sm:$0xff]
        %v269 = vld [vmem:[%s227 + $0x48] sm:$0xff]
        %v270 = vld [vmem:[%s227 + $0x50] sm:$0xff]
        %v271 = vld [vmem:[%s227 + $0x58] sm:$0xff]
        %v272 = vld [vmem:[%s227 + $0x60] sm:$0xff]
        %v273 = vld [vmem:[%s227 + $0x68] sm:$0xff]
        %v274 = vld [vmem:[%s227 + $0x70] sm:$0xff]
        %v275 = vld [vmem:[%s227 + $0x78] sm:$0xff]
        %v276 = vld [vmem:[%s227 + $0x80] sm:$0xff]
        %v277 = vld [vmem:[%s227 + $0x88] sm:$0xff]
        %v278 = vld [vmem:[%s227 + $0x90] sm:$0xff]
        %v279 = vld [vmem:[%s227 + $0x98] sm:$0xff]
        %v280 = vld [vmem:[%s227 + $0xa0] sm:$0xff]
        %v281 = vld [vmem:[%s227 + $0xa8] sm:$0xff]
        %v282 = vld [vmem:[%s227 + $0xb0] sm:$0xff]
        %v283 = vld [vmem:[%s227 + $0xb8] sm:$0xff]
        %v284 = vld [vmem:[%s227 + $0xc0] sm:$0xff]
        %v285 = vld [vmem:[%s227 + $0xc8] sm:$0xff]
        %v286 = vld [vmem:[%s227 + $0xd0] sm:$0xff]
        %v287 = vld [vmem:[%s227 + $0xd8] sm:$0xff]
        %v288 = vld [vmem:[%s227 + $0xe0] sm:$0xff]
        %v289 = vld [vmem:[%s227 + $0xe8] sm:$0xff]
        %v290 = vld [vmem:[%s227 + $0xf0] sm:$0xff]
        %v291 = vld [vmem:[%s227 + $0xf8] sm:$0xff]
        %v292 = vld [vmem:[#allocation5] sm:$0xff]
        %v293 = vld [vmem:[#allocation5 + $0x8] sm:$0xff]
        %v294 = vld [vmem:[#allocation5 + $0x10] sm:$0xff]
        %v295 = vld [vmem:[#allocation5 + $0x18] sm:$0xff]
        %v296 = vld [vmem:[#allocation5 + $0x20] sm:$0xff]
        %v297 = vld [vmem:[#allocation5 + $0x28] sm:$0xff]
        %v298 = vld [vmem:[#allocation5 + $0x30] sm:$0xff]
        %v299 = vld [vmem:[#allocation5 + $0x38] sm:$0xff]
        %v300 = vld [vmem:[#allocation5 + $0x40] sm:$0xff]
        %v301 = vld [vmem:[#allocation5 + $0x48] sm:$0xff]
        %v302 = vld [vmem:[#allocation5 + $0x50] sm:$0xff]
        %v303 = vld [vmem:[#allocation5 + $0x58] sm:$0xff]
        %v304 = vld [vmem:[#allocation5 + $0x60] sm:$0xff]
        %v305 = vld [vmem:[#allocation5 + $0x68] sm:$0xff]
        %v306 = vld [vmem:[#allocation5 + $0x70] sm:$0xff]
        %v307 = vld [vmem:[#allocation5 + $0x78] sm:$0xff]
        %v308 = vld [vmem:[%s2] sm:$0x1]
        %v310 = vlaneseq
        %v311 = vshrl.u32 %v310, 7
        %v312 = vsub.s32 0, %v311
        %v313 = vrot.slane %v308, %v312
        %315 = vmatprep.subr.mxu0 0.0
        %316 = vmatpush1.msra.mxu0 %v292
        %317 = vmatprep.subr.mxu0 0.0
        %318 = vmatpush1.msra.mxu0 %v293
        %319 = vmatprep.subr.mxu0 0.0
        %320 = vmatpush1.msra.mxu0 %v294
        %321 = vmatprep.subr.mxu0 0.0
        %322 = vmatpush1.msra.mxu0 %v295
        %323 = vmatprep.subr.mxu0 0.0
        %324 = vmatpush1.msra.mxu0 %v296
        %325 = vmatprep.subr.mxu0 0.0
        %326 = vmatpush1.msra.mxu0 %v297
        %327 = vmatprep.subr.mxu0 0.0
        %328 = vmatpush1.msra.mxu0 %v298
        %329 = vmatprep.subr.mxu0 0.0
        %330 = vmatpush1.msra.mxu0 %v299
        %331 = vmatprep.subr.mxu0 0.0
        %332 = vmatpush1.msra.mxu0 %v300
        %333 = vmatprep.subr.mxu0 0.0
        %334 = vmatpush1.msra.mxu0 %v301
        %335 = vmatprep.subr.mxu0 0.0
        %336 = vmatpush1.msra.mxu0 %v302
        %337 = vmatprep.subr.mxu0 0.0
        %338 = vmatpush1.msra.mxu0 %v303
        %339 = vmatprep.subr.mxu0 0.0
        %340 = vmatpush1.msra.mxu0 %v304
        %341 = vmatprep.subr.mxu0 0.0
        %342 = vmatpush1.msra.mxu0 %v305
        %343 = vmatprep.subr.mxu0 0.0
        %344 = vmatpush1.msra.mxu0 %v306
        %345 = vmatprep.subr.mxu0 0.0
        %346 = vmatpush1.msra.mxu0 %v307
        %347 = vmatprep.subr.mxu0 0.0
        %348 = vmatpush1.msra.mxu0 0.0
        %349 = vmatprep.subr.mxu0 0.0
        %350 = vmatpush1.msra.mxu0 0.0
        %351 = vmatprep.subr.mxu0 0.0
        %352 = vmatpush1.msra.mxu0 0.0
        %353 = vmatprep.subr.mxu0 0.0
        %354 = vmatpush1.msra.mxu0 0.0
        %355 = vmatprep.subr.mxu0 0.0
        %356 = vmatpush1.msra.mxu0 0.0
        %357 = vmatprep.subr.mxu0 0.0
        %358 = vmatpush1.msra.mxu0 0.0
        %359 = vmatprep.subr.mxu0 0.0
        %360 = vmatpush1.msra.mxu0 0.0
        %361 = vmatprep.subr.mxu0 0.0
        %362 = vmatpush1.msra.mxu0 0.0
        %363 = vmatprep.subr.mxu0 0.0
        %364 = vmatpush1.msra.mxu0 0.0
        %365 = vmatprep.subr.mxu0 0.0
        %366 = vmatpush1.msra.mxu0 0.0
        %367 = vmatprep.subr.mxu0 0.0
        %368 = vmatpush1.msra.mxu0 0.0
        %369 = vmatprep.subr.mxu0 0.0
        %370 = vmatpush1.msra.mxu0 0.0
        %371 = vmatprep.subr.mxu0 0.0
        %372 = vmatpush1.msra.mxu0 0.0
        %373 = vmatprep.subr.mxu0 0.0
        %374 = vmatpush1.msra.mxu0 0.0
        %375 = vmatprep.subr.mxu0 0.0
        %376 = vmatpush1.msra.mxu0 0.0
        %377 = vmatprep.subr.mxu0 0.0
        %378 = vmatpush1.msra.mxu0 0.0
        %379 = vmatprep.mubr.f32.mxu0 0.0
        %380 = vmatmul.mubr.f32.gmra.mrb[0].mxu0 %v260
        %v381 = vpop.f32.mrb[0].mxu0
        %v382 = vadd.f32 %v313, %v381
        %v383 = vpop.f32.mrb[0].mxu0
        %384 = vmatprep.mubr.f32.mxu0 0.0
        %385 = vmatmul.mubr.f32.gmra.mrb[0].mxu0 %v261
        %v386 = vpop.f32.mrb[0].mxu0
        %v387 = vadd.f32 %v313, %v386
        %v388 = vpop.f32.mrb[0].mxu0
        %389 = vmatprep.mubr.f32.mxu0 0.0
        %390 = vmatmul.mubr.f32.gmra.mrb[0].mxu0 %v262
        %v391 = vpop.f32.mrb[0].mxu0
        %v392 = vadd.f32 %v313, %v391
        %v393 = vpop.f32.mrb[0].mxu0
        %394 = vmatprep.mubr.f32.mxu0 0.0
        %395 = vmatmul.mubr.f32.gmra.mrb[0].mxu0 %v263
        %v396 = vpop.f32.mrb[0].mxu0
        %v397 = vadd.f32 %v313, %v396
        %v398 = vpop.f32.mrb[0].mxu0
        %399 = vmatprep.mubr.f32.mxu0 0.0
        %400 = vmatmul.mubr.f32.gmra.mrb[0].mxu0 %v264
        %v401 = vpop.f32.mrb[0].mxu0
        %v402 = vadd.f32 %v313, %v401
        %v403 = vpop.f32.mrb[0].mxu0
        %404 = vmatprep.mubr.f32.mxu0 0.0
        %405 = vmatmul.mubr.f32.gmra.mrb[0].mxu0 %v265
        %v406 = vpop.f32.mrb[0].mxu0
        %v407 = vadd.f32 %v313, %v406
        %v408 = vpop.f32.mrb[0].mxu0
        %409 = vmatprep.mubr.f32.mxu0 0.0
        %410 = vmatmul.mubr.f32.gmra.mrb[0].mxu0 %v266
        %v411 = vpop.f32.mrb[0].mxu0
        %v412 = vadd.f32 %v313, %v411
        %v413 = vpop.f32.mrb[0].mxu0
        %414 = vmatprep.mubr.f32.mxu0 0.0
        %415 = vmatmul.mubr.f32.gmra.mrb[0].mxu0 %v267
        %v416 = vpop.f32.mrb[0].mxu0
        %v417 = vadd.f32 %v313, %v416
        %v418 = vpop.f32.mrb[0].mxu0
        %419 = vmatprep.mubr.f32.mxu0 0.0
        %420 = vmatmul.mubr.f32.gmra.mrb[0].mxu0 %v268
        %v421 = vpop.f32.mrb[0].mxu0
        %v422 = vadd.f32 %v313, %v421
        %v423 = vpop.f32.mrb[0].mxu0
        %424 = vmatprep.mubr.f32.mxu0 0.0
        %425 = vmatmul.mubr.f32.gmra.mrb[0].mxu0 %v269
        %v426 = vpop.f32.mrb[0].mxu0
        %v427 = vadd.f32 %v313, %v426
        %v428 = vpop.f32.mrb[0].mxu0
        %429 = vmatprep.mubr.f32.mxu0 0.0
        %430 = vmatmul.mubr.f32.gmra.mrb[0].mxu0 %v270
        %v431 = vpop.f32.mrb[0].mxu0
        %v432 = vadd.f32 %v313, %v431
        %v433 = vpop.f32.mrb[0].mxu0
        %434 = vmatprep.mubr.f32.mxu0 0.0
        %435 = vmatmul.mubr.f32.gmra.mrb[0].mxu0 %v271
        %v436 = vpop.f32.mrb[0].mxu0
        %v437 = vadd.f32 %v313, %v436
        %v438 = vpop.f32.mrb[0].mxu0
        %439 = vmatprep.mubr.f32.mxu0 0.0
        %440 = vmatmul.mubr.f32.gmra.mrb[0].mxu0 %v272
        %v441 = vpop.f32.mrb[0].mxu0
        %v442 = vadd.f32 %v313, %v441
        %v443 = vpop.f32.mrb[0].mxu0
        %444 = vmatprep.mubr.f32.mxu0 0.0
        %445 = vmatmul.mubr.f32.gmra.mrb[0].mxu0 %v273
        %v446 = vpop.f32.mrb[0].mxu0
        %v447 = vadd.f32 %v313, %v446
        %v448 = vpop.f32.mrb[0].mxu0
        %449 = vmatprep.mubr.f32.mxu0 0.0
        %450 = vmatmul.mubr.f32.gmra.mrb[0].mxu0 %v274
        %v451 = vpop.f32.mrb[0].mxu0
        %v452 = vadd.f32 %v313, %v451
        %v453 = vpop.f32.mrb[0].mxu0
        %454 = vmatprep.mubr.f32.mxu0 0.0
        %455 = vmatmul.mubr.f32.gmra.mrb[0].mxu0 %v275
        %v456 = vpop.f32.mrb[0].mxu0
        %v457 = vadd.f32 %v313, %v456
        %v458 = vpop.f32.mrb[0].mxu0
        %459 = vmatprep.mubr.f32.mxu0 0.0
        %460 = vmatmul.mubr.f32.gmra.mrb[0].mxu0 %v276
        %v461 = vpop.f32.mrb[0].mxu0
        %v462 = vadd.f32 %v313, %v461
        %v463 = vpop.f32.mrb[0].mxu0
        %464 = vmatprep.mubr.f32.mxu0 0.0
        %465 = vmatmul.mubr.f32.gmra.mrb[0].mxu0 %v277
        %v466 = vpop.f32.mrb[0].mxu0
        %v467 = vadd.f32 %v313, %v466
        %v468 = vpop.f32.mrb[0].mxu0
        %469 = vmatprep.mubr.f32.mxu0 0.0
        %470 = vmatmul.mubr.f32.gmra.mrb[0].mxu0 %v278
        %v471 = vpop.f32.mrb[0].mxu0
        %v472 = vadd.f32 %v313, %v471
        %v473 = vpop.f32.mrb[0].mxu0
        %474 = vmatprep.mubr.f32.mxu0 0.0
        %475 = vmatmul.mubr.f32.gmra.mrb[0].mxu0 %v279
        %v476 = vpop.f32.mrb[0].mxu0
        %v477 = vadd.f32 %v313, %v476
        %v478 = vpop.f32.mrb[0].mxu0
        %479 = vmatprep.mubr.f32.mxu0 0.0
        %480 = vmatmul.mubr.f32.gmra.mrb[0].mxu0 %v280
        %v481 = vpop.f32.mrb[0].mxu0
        %v482 = vadd.f32 %v313, %v481
        %v483 = vpop.f32.mrb[0].mxu0
        %484 = vmatprep.mubr.f32.mxu0 0.0
        %485 = vmatmul.mubr.f32.gmra.mrb[0].mxu0 %v281
        %v486 = vpop.f32.mrb[0].mxu0
        %v487 = vadd.f32 %v313, %v486
        %v488 = vpop.f32.mrb[0].mxu0
        %489 = vmatprep.mubr.f32.mxu0 0.0
        %490 = vmatmul.mubr.f32.gmra.mrb[0].mxu0 %v282
        %v491 = vpop.f32.mrb[0].mxu0
        %v492 = vadd.f32 %v313, %v491
        %v493 = vpop.f32.mrb[0].mxu0
        %494 = vmatprep.mubr.f32.mxu0 0.0
        %495 = vmatmul.mubr.f32.gmra.mrb[0].mxu0 %v283
        %v496 = vpop.f32.mrb[0].mxu0
        %v497 = vadd.f32 %v313, %v496
        %v498 = vpop.f32.mrb[0].mxu0
        %499 = vmatprep.mubr.f32.mxu0 0.0
        %500 = vmatmul.mubr.f32.gmra.mrb[0].mxu0 %v284
        %v501 = vpop.f32.mrb[0].mxu0
        %v502 = vadd.f32 %v313, %v501
        %v503 = vpop.f32.mrb[0].mxu0
        %504 = vmatprep.mubr.f32.mxu0 0.0
        %505 = vmatmul.mubr.f32.gmra.mrb[0].mxu0 %v285
        %v506 = vpop.f32.mrb[0].mxu0
        %v507 = vadd.f32 %v313, %v506
        %v508 = vpop.f32.mrb[0].mxu0
        %509 = vmatprep.mubr.f32.mxu0 0.0
        %510 = vmatmul.mubr.f32.gmra.mrb[0].mxu0 %v286
        %v511 = vpop.f32.mrb[0].mxu0
        %v512 = vadd.f32 %v313, %v511
        %v513 = vpop.f32.mrb[0].mxu0
        %514 = vmatprep.mubr.f32.mxu0 0.0
        %515 = vmatmul.mubr.f32.gmra.mrb[0].mxu0 %v287
        %v516 = vpop.f32.mrb[0].mxu0
        %v517 = vadd.f32 %v313, %v516
        %v518 = vpop.f32.mrb[0].mxu0
        %519 = vmatprep.mubr.f32.mxu0 0.0
        %520 = vmatmul.mubr.f32.gmra.mrb[0].mxu0 %v288
        %v521 = vpop.f32.mrb[0].mxu0
        %v522 = vadd.f32 %v313, %v521
        %v523 = vpop.f32.mrb[0].mxu0
        %524 = vmatprep.mubr.f32.mxu0 0.0
        %525 = vmatmul.mubr.f32.gmra.mrb[0].mxu0 %v289
        %v526 = vpop.f32.mrb[0].mxu0
        %v527 = vadd.f32 %v313, %v526
        %v528 = vpop.f32.mrb[0].mxu0
        %529 = vmatprep.mubr.f32.mxu0 0.0
        %530 = vmatmul.mubr.f32.gmra.mrb[0].mxu0 %v290
        %v531 = vpop.f32.mrb[0].mxu0
        %v532 = vadd.f32 %v313, %v531
        %v533 = vpop.f32.mrb[0].mxu0
        %534 = vmatprep.mubr.f32.mxu0 0.0
        %535 = vmatmul.mubr.f32.gmra.mrb[0].mxu0 %v291
        %v536 = vpop.f32.mrb[0].mxu0
        %v537 = vadd.f32 %v313, %v536
        %v538 = vpop.f32.mrb[0].mxu0
        %539 = vdwg.mxu0
        %v540 = vlaneseq
        %v541 = vshrl.u32 %v540, 7
        %v542 = vadd.s32 %v541, 8
        %v543 = vadd.s32 %v541, 16
        %v544 = vadd.s32 %v541, 24
        %v545 = vadd.s32 %v541, 32
        %v546 = vadd.s32 %v541, 40
        %v547 = vadd.s32 %v541, 48
        %v548 = vadd.s32 %v541, 56
        %v549 = vadd.s32 %v541, 64
        %v550 = vadd.s32 %v541, 72
        %v551 = vadd.s32 %v541, 80
        %v552 = vadd.s32 %v541, 88
        %v553 = vadd.s32 %v541, 96
        %v554 = vadd.s32 %v541, 104
        %v555 = vadd.s32 %v541, 112
        %v556 = vadd.s32 %v541, 120
        %v557 = vadd.s32 %v541, 128
        %v558 = vadd.s32 %v541, 136
        %v559 = vadd.s32 %v541, 144
        %v560 = vadd.s32 %v541, 152
        %v561 = vadd.s32 %v541, 160
        %v562 = vadd.s32 %v541, 168
        %v563 = vadd.s32 %v541, 176
        %v564 = vadd.s32 %v541, 184
        %v565 = vadd.s32 %v541, 192
        %v566 = vadd.s32 %v541, 200
        %v567 = vadd.s32 %v541, 208
        %v568 = vadd.s32 %v541, 216
        %v569 = vadd.s32 %v541, 224
        %v570 = vadd.s32 %v541, 232
        %v571 = vadd.s32 %v541, 240
        %v572 = vadd.s32 %v541, 248
        %v573 = vand.u32 %v541, 15
        %v574 = vand.u32 %v542, 15
        %v575 = vand.u32 %v543, 15
        %v576 = vand.u32 %v544, 15
        %v577 = vand.u32 %v545, 15
        %v578 = vand.u32 %v546, 15
        %v579 = vand.u32 %v547, 15
        %v580 = vand.u32 %v548, 15
        %v581 = vand.u32 %v549, 15
        %v582 = vand.u32 %v550, 15
        %v583 = vand.u32 %v551, 15
        %v584 = vand.u32 %v552, 15
        %v585 = vand.u32 %v553, 15
        %v586 = vand.u32 %v554, 15
        %v587 = vand.u32 %v555, 15
        %v588 = vand.u32 %v556, 15
        %v589 = vand.u32 %v557, 15
        %v590 = vand.u32 %v558, 15
        %v591 = vand.u32 %v559, 15
        %v592 = vand.u32 %v560, 15
        %v593 = vand.u32 %v561, 15
        %v594 = vand.u32 %v562, 15
        %v595 = vand.u32 %v563, 15
        %v596 = vand.u32 %v564, 15
        %v597 = vand.u32 %v565, 15
        %v598 = vand.u32 %v566, 15
        %v599 = vand.u32 %v567, 15
        %v600 = vand.u32 %v568, 15
        %v601 = vand.u32 %v569, 15
        %v602 = vand.u32 %v570, 15
        %v603 = vand.u32 %v571, 15
        %v604 = vand.u32 %v572, 15
        %vm605 = vcmp.ge.s32.totalorder %v573, 1
        %vm606 = vcmp.ge.s32.totalorder %v574, 1
        %vm607 = vcmp.ge.s32.totalorder %v575, 1
        %vm608 = vcmp.ge.s32.totalorder %v576, 1
        %vm609 = vcmp.ge.s32.totalorder %v577, 1
        %vm610 = vcmp.ge.s32.totalorder %v578, 1
        %vm611 = vcmp.ge.s32.totalorder %v579, 1
        %vm612 = vcmp.ge.s32.totalorder %v580, 1
        %vm613 = vcmp.ge.s32.totalorder %v581, 1
        %vm614 = vcmp.ge.s32.totalorder %v582, 1
        %vm615 = vcmp.ge.s32.totalorder %v583, 1
        %vm616 = vcmp.ge.s32.totalorder %v584, 1
        %vm617 = vcmp.ge.s32.totalorder %v585, 1
        %vm618 = vcmp.ge.s32.totalorder %v586, 1
        %vm619 = vcmp.ge.s32.totalorder %v587, 1
        %vm620 = vcmp.ge.s32.totalorder %v588, 1
        %vm621 = vcmp.ge.s32.totalorder %v589, 1
        %vm622 = vcmp.ge.s32.totalorder %v590, 1
        %vm623 = vcmp.ge.s32.totalorder %v591, 1
        %vm624 = vcmp.ge.s32.totalorder %v592, 1
        %vm625 = vcmp.ge.s32.totalorder %v593, 1
        %vm626 = vcmp.ge.s32.totalorder %v594, 1
        %vm627 = vcmp.ge.s32.totalorder %v595, 1
        %vm628 = vcmp.ge.s32.totalorder %v596, 1
        %vm629 = vcmp.ge.s32.totalorder %v597, 1
        %vm630 = vcmp.ge.s32.totalorder %v598, 1
        %vm631 = vcmp.ge.s32.totalorder %v599, 1
        %vm632 = vcmp.ge.s32.totalorder %v600, 1
        %vm633 = vcmp.ge.s32.totalorder %v601, 1
        %vm634 = vcmp.ge.s32.totalorder %v602, 1
        %vm635 = vcmp.ge.s32.totalorder %v603, 1
        %vm636 = vcmp.ge.s32.totalorder %v604, 1
        %v637 = vrot.slane %v382, 7
        %v638 = vrot.slane %v387, 7
        %v639 = vrot.slane %v392, 7
        %v640 = vrot.slane %v397, 7
        %v641 = vrot.slane %v402, 7
        %v642 = vrot.slane %v407, 7
        %v643 = vrot.slane %v412, 7
        %v644 = vrot.slane %v417, 7
        %v645 = vrot.slane %v422, 7
        %v646 = vrot.slane %v427, 7
        %v647 = vrot.slane %v432, 7
        %v648 = vrot.slane %v437, 7
        %v649 = vrot.slane %v442, 7
        %v650 = vrot.slane %v447, 7
        %v651 = vrot.slane %v452, 7
        %v652 = vrot.slane %v457, 7
        %v653 = vrot.slane %v462, 7
        %v654 = vrot.slane %v467, 7
        %v655 = vrot.slane %v472, 7
        %v656 = vrot.slane %v477, 7
        %v657 = vrot.slane %v482, 7
        %v658 = vrot.slane %v487, 7
        %v659 = vrot.slane %v492, 7
        %v660 = vrot.slane %v497, 7
        %v661 = vrot.slane %v502, 7
        %v662 = vrot.slane %v507, 7
        %v663 = vrot.slane %v512, 7
        %v664 = vrot.slane %v517, 7
        %v665 = vrot.slane %v522, 7
        %v666 = vrot.slane %v527, 7
        %v667 = vrot.slane %v532, 7
        %v668 = vrot.slane %v537, 7
        %vm669 = vcmp.lt.s32.totalorder %v541, 1
        %v670 = vsel %vm669, %v667, %v668
        %v671 = vsel %vm669, %v666, %v667
        %v672 = vsel %vm669, %v665, %v666
        %v673 = vsel %vm669, %v664, %v665
        %v674 = vsel %vm669, %v663, %v664
        %v675 = vsel %vm669, %v662, %v663
        %v676 = vsel %vm669, %v661, %v662
        %v677 = vsel %vm669, %v660, %v661
        %v678 = vsel %vm669, %v659, %v660
        %v679 = vsel %vm669, %v658, %v659
        %v680 = vsel %vm669, %v657, %v658
        %v681 = vsel %vm669, %v656, %v657
        %v682 = vsel %vm669, %v655, %v656
        %v683 = vsel %vm669, %v654, %v655
        %v684 = vsel %vm669, %v653, %v654
        %v685 = vsel %vm669, %v652, %v653
        %v686 = vsel %vm669, %v651, %v652
        %v687 = vsel %vm669, %v650, %v651
        %v688 = vsel %vm669, %v649, %v650
        %v689 = vsel %vm669, %v648, %v649
        %v690 = vsel %vm669, %v647, %v648
        %v691 = vsel %vm669, %v646, %v647
        %v692 = vsel %vm669, %v645, %v646
        %v693 = vsel %vm669, %v644, %v645
        %v694 = vsel %vm669, %v643, %v644
        %v695 = vsel %vm669, %v642, %v643
        %v696 = vsel %vm669, %v641, %v642
        %v697 = vsel %vm669, %v640, %v641
        %v698 = vsel %vm669, %v639, %v640
        %v699 = vsel %vm669, %v638, %v639
        %v700 = vsel %vm669, %v637, %v638
        %v701 = vsel %vm669, %v668, %v637
        %v702 = vsel %vm605, %v701, 0.0
        %v703 = vsel %vm606, %v700, 0.0
        %v704 = vsel %vm607, %v699, 0.0
        %v705 = vsel %vm608, %v698, 0.0
        %v706 = vsel %vm609, %v697, 0.0
        %v707 = vsel %vm610, %v696, 0.0
        %v708 = vsel %vm611, %v695, 0.0
        %v709 = vsel %vm612, %v694, 0.0
        %v710 = vsel %vm613, %v693, 0.0
        %v711 = vsel %vm614, %v692, 0.0
        %v712 = vsel %vm615, %v691, 0.0
        %v713 = vsel %vm616, %v690, 0.0
        %v714 = vsel %vm617, %v689, 0.0
        %v715 = vsel %vm618, %v688, 0.0
        %v716 = vsel %vm619, %v687, 0.0
        %v717 = vsel %vm620, %v686, 0.0
        %v718 = vsel %vm621, %v685, 0.0
        %v719 = vsel %vm622, %v684, 0.0
        %v720 = vsel %vm623, %v683, 0.0
        %v721 = vsel %vm624, %v682, 0.0
        %v722 = vsel %vm625, %v681, 0.0
        %v723 = vsel %vm626, %v680, 0.0
        %v724 = vsel %vm627, %v679, 0.0
        %v725 = vsel %vm628, %v678, 0.0
        %v726 = vsel %vm629, %v677, 0.0
        %v727 = vsel %vm630, %v676, 0.0
        %v728 = vsel %vm631, %v675, 0.0
        %v729 = vsel %vm632, %v674, 0.0
        %v730 = vsel %vm633, %v673, 0.0
        %v731 = vsel %vm634, %v672, 0.0
        %v732 = vsel %vm635, %v671, 0.0
        %v733 = vsel %vm636, %v670, 0.0
        %v734 = vadd.f32 %v382, %v702
        %v735 = vadd.f32 %v387, %v703
        %v736 = vadd.f32 %v392, %v704
        %v737 = vadd.f32 %v397, %v705
        %v738 = vadd.f32 %v402, %v706
        %v739 = vadd.f32 %v407, %v707
        %v740 = vadd.f32 %v412, %v708
        %v741 = vadd.f32 %v417, %v709
        %v742 = vadd.f32 %v422, %v710
        %v743 = vadd.f32 %v427, %v711
        %v744 = vadd.f32 %v432, %v712
        %v745 = vadd.f32 %v437, %v713
        %v746 = vadd.f32 %v442, %v714
        %v747 = vadd.f32 %v447, %v715
        %v748 = vadd.f32 %v452, %v716
        %v749 = vadd.f32 %v457, %v717
        %v750 = vadd.f32 %v462, %v718
        %v751 = vadd.f32 %v467, %v719
        %v752 = vadd.f32 %v472, %v720
        %v753 = vadd.f32 %v477, %v721
        %v754 = vadd.f32 %v482, %v722
        %v755 = vadd.f32 %v487, %v723
        %v756 = vadd.f32 %v492, %v724
        %v757 = vadd.f32 %v497, %v725
        %v758 = vadd.f32 %v502, %v726
        %v759 = vadd.f32 %v507, %v727
        %v760 = vadd.f32 %v512, %v728
        %v761 = vadd.f32 %v517, %v729
        %v762 = vadd.f32 %v522, %v730
        %v763 = vadd.f32 %v527, %v731
        %v764 = vadd.f32 %v532, %v732
        %v765 = vadd.f32 %v537, %v733
        %vm766 = vcmp.ge.s32.totalorder %v573, 2
        %vm767 = vcmp.ge.s32.totalorder %v574, 2
        %vm768 = vcmp.ge.s32.totalorder %v575, 2
        %vm769 = vcmp.ge.s32.totalorder %v576, 2
        %vm770 = vcmp.ge.s32.totalorder %v577, 2
        %vm771 = vcmp.ge.s32.totalorder %v578, 2
        %vm772 = vcmp.ge.s32.totalorder %v579, 2
        %vm773 = vcmp.ge.s32.totalorder %v580, 2
        %vm774 = vcmp.ge.s32.totalorder %v581, 2
        %vm775 = vcmp.ge.s32.totalorder %v582, 2
        %vm776 = vcmp.ge.s32.totalorder %v583, 2
        %vm777 = vcmp.ge.s32.totalorder %v584, 2
        %vm778 = vcmp.ge.s32.totalorder %v585, 2
        %vm779 = vcmp.ge.s32.totalorder %v586, 2
        %vm780 = vcmp.ge.s32.totalorder %v587, 2
        %vm781 = vcmp.ge.s32.totalorder %v588, 2
        %vm782 = vcmp.ge.s32.totalorder %v589, 2
        %vm783 = vcmp.ge.s32.totalorder %v590, 2
        %vm784 = vcmp.ge.s32.totalorder %v591, 2
        %vm785 = vcmp.ge.s32.totalorder %v592, 2
        %vm786 = vcmp.ge.s32.totalorder %v593, 2
        %vm787 = vcmp.ge.s32.totalorder %v594, 2
        %vm788 = vcmp.ge.s32.totalorder %v595, 2
        %vm789 = vcmp.ge.s32.totalorder %v596, 2
        %vm790 = vcmp.ge.s32.totalorder %v597, 2
        %vm791 = vcmp.ge.s32.totalorder %v598, 2
        %vm792 = vcmp.ge.s32.totalorder %v599, 2
        %vm793 = vcmp.ge.s32.totalorder %v600, 2
        %vm794 = vcmp.ge.s32.totalorder %v601, 2
        %vm795 = vcmp.ge.s32.totalorder %v602, 2
        %vm796 = vcmp.ge.s32.totalorder %v603, 2
        %vm797 = vcmp.ge.s32.totalorder %v604, 2
        %v798 = vrot.slane %v382, 6
        %v799 = vrot.slane %v387, 6
        %v800 = vrot.slane %v392, 6
        %v801 = vrot.slane %v397, 6
        %v802 = vrot.slane %v402, 6
        %v803 = vrot.slane %v407, 6
        %v804 = vrot.slane %v412, 6
        %v805 = vrot.slane %v417, 6
        %v806 = vrot.slane %v422, 6
        %v807 = vrot.slane %v427, 6
        %v808 = vrot.slane %v432, 6
        %v809 = vrot.slane %v437, 6
        %v810 = vrot.slane %v442, 6
        %v811 = vrot.slane %v447, 6
        %v812 = vrot.slane %v452, 6
        %v813 = vrot.slane %v457, 6
        %v814 = vrot.slane %v462, 6
        %v815 = vrot.slane %v467, 6
        %v816 = vrot.slane %v472, 6
        %v817 = vrot.slane %v477, 6
        %v818 = vrot.slane %v482, 6
        %v819 = vrot.slane %v487, 6
        %v820 = vrot.slane %v492, 6
        %v821 = vrot.slane %v497, 6
        %v822 = vrot.slane %v502, 6
        %v823 = vrot.slane %v507, 6
        %v824 = vrot.slane %v512, 6
        %v825 = vrot.slane %v517, 6
        %v826 = vrot.slane %v522, 6
        %v827 = vrot.slane %v527, 6
        %v828 = vrot.slane %v532, 6
        %v829 = vrot.slane %v537, 6
        %vm830 = vcmp.lt.s32.totalorder %v541, 2
        %v831 = vsel %vm830, %v828, %v829
        %v832 = vsel %vm830, %v827, %v828
        %v833 = vsel %vm830, %v826, %v827
        %v834 = vsel %vm830, %v825, %v826
        %v835 = vsel %vm830, %v824, %v825
        %v836 = vsel %vm830, %v823, %v824
        %v837 = vsel %vm830, %v822, %v823
        %v838 = vsel %vm830, %v821, %v822
        %v839 = vsel %vm830, %v820, %v821
        %v840 = vsel %vm830, %v819, %v820
        %v841 = vsel %vm830, %v818, %v819
        %v842 = vsel %vm830, %v817, %v818
        %v843 = vsel %vm830, %v816, %v817
        %v844 = vsel %vm830, %v815, %v816
        %v845 = vsel %vm830, %v814, %v815
        %v846 = vsel %vm830, %v813, %v814
        %v847 = vsel %vm830, %v812, %v813
        %v848 = vsel %vm830, %v811, %v812
        %v849 = vsel %vm830, %v810, %v811
        %v850 = vsel %vm830, %v809, %v810
        %v851 = vsel %vm830, %v808, %v809
        %v852 = vsel %vm830, %v807, %v808
        %v853 = vsel %vm830, %v806, %v807
        %v854 = vsel %vm830, %v805, %v806
        %v855 = vsel %vm830, %v804, %v805
        %v856 = vsel %vm830, %v803, %v804
        %v857 = vsel %vm830, %v802, %v803
        %v858 = vsel %vm830, %v801, %v802
        %v859 = vsel %vm830, %v800, %v801
        %v860 = vsel %vm830, %v799, %v800
        %v861 = vsel %vm830, %v798, %v799
        %v862 = vsel %vm830, %v829, %v798
        %v863 = vsel %vm766, %v862, 0.0
        %v864 = vsel %vm767, %v861, 0.0
        %v865 = vsel %vm768, %v860, 0.0
        %v866 = vsel %vm769, %v859, 0.0
        %v867 = vsel %vm770, %v858, 0.0
        %v868 = vsel %vm771, %v857, 0.0
        %v869 = vsel %vm772, %v856, 0.0
        %v870 = vsel %vm773, %v855, 0.0
        %v871 = vsel %vm774, %v854, 0.0
        %v872 = vsel %vm775, %v853, 0.0
        %v873 = vsel %vm776, %v852, 0.0
        %v874 = vsel %vm777, %v851, 0.0
        %v875 = vsel %vm778, %v850, 0.0
        %v876 = vsel %vm779, %v849, 0.0
        %v877 = vsel %vm780, %v848, 0.0
        %v878 = vsel %vm781, %v847, 0.0
        %v879 = vsel %vm782, %v846, 0.0
        %v880 = vsel %vm783, %v845, 0.0
        %v881 = vsel %vm784, %v844, 0.0
        %v882 = vsel %vm785, %v843, 0.0
        %v883 = vsel %vm786, %v842, 0.0
        %v884 = vsel %vm787, %v841, 0.0
        %v885 = vsel %vm788, %v840, 0.0
        %v886 = vsel %vm789, %v839, 0.0
        %v887 = vsel %vm790, %v838, 0.0
        %v888 = vsel %vm791, %v837, 0.0
        %v889 = vsel %vm792, %v836, 0.0
        %v890 = vsel %vm793, %v835, 0.0
        %v891 = vsel %vm794, %v834, 0.0
        %v892 = vsel %vm795, %v833, 0.0
        %v893 = vsel %vm796, %v832, 0.0
        %v894 = vsel %vm797, %v831, 0.0
        %v895 = vadd.f32 %v734, %v863
        %v896 = vadd.f32 %v735, %v864
        %v897 = vadd.f32 %v736, %v865
        %v898 = vadd.f32 %v737, %v866
        %v899 = vadd.f32 %v738, %v867
        %v900 = vadd.f32 %v739, %v868
        %v901 = vadd.f32 %v740, %v869
        %v902 = vadd.f32 %v741, %v870
        %v903 = vadd.f32 %v742, %v871
        %v904 = vadd.f32 %v743, %v872
        %v905 = vadd.f32 %v744, %v873
        %v906 = vadd.f32 %v745, %v874
        %v907 = vadd.f32 %v746, %v875
        %v908 = vadd.f32 %v747, %v876
        %v909 = vadd.f32 %v748, %v877
        %v910 = vadd.f32 %v749, %v878
        %v911 = vadd.f32 %v750, %v879
        %v912 = vadd.f32 %v751, %v880
        %v913 = vadd.f32 %v752, %v881
        %v914 = vadd.f32 %v753, %v882
        %v915 = vadd.f32 %v754, %v883
        %v916 = vadd.f32 %v755, %v884
        %v917 = vadd.f32 %v756, %v885
        %v918 = vadd.f32 %v757, %v886
        %v919 = vadd.f32 %v758, %v887
        %v920 = vadd.f32 %v759, %v888
        %v921 = vadd.f32 %v760, %v889
        %v922 = vadd.f32 %v761, %v890
        %v923 = vadd.f32 %v762, %v891
        %v924 = vadd.f32 %v763, %v892
        %v925 = vadd.f32 %v764, %v893
        %v926 = vadd.f32 %v765, %v894
        %927 = vadd.xlane.f32.xlu0 %v895
        %v928 = vpop.xlane.xlu0 %927
        %929 = vadd.xlane.f32.xlu0 %v896
        %v930 = vpop.xlane.xlu0 %929
        %931 = vadd.xlane.f32.xlu0 %v897
        %v932 = vpop.xlane.xlu0 %931
        %933 = vadd.xlane.f32.xlu0 %v898
        %v934 = vpop.xlane.xlu0 %933
        %935 = vadd.xlane.f32.xlu0 %v899
        %v936 = vpop.xlane.xlu0 %935
        %937 = vadd.xlane.f32.xlu0 %v900
        %v938 = vpop.xlane.xlu0 %937
        %939 = vadd.xlane.f32.xlu0 %v901
        %v940 = vpop.xlane.xlu0 %939
        %941 = vadd.xlane.f32.xlu0 %v902
        %v942 = vpop.xlane.xlu0 %941
        %943 = vadd.xlane.f32.xlu0 %v903
        %v944 = vpop.xlane.xlu0 %943
        %945 = vadd.xlane.f32.xlu0 %v904
        %v946 = vpop.xlane.xlu0 %945
        %947 = vadd.xlane.f32.xlu0 %v905
        %v948 = vpop.xlane.xlu0 %947
        %949 = vadd.xlane.f32.xlu0 %v906
        %v950 = vpop.xlane.xlu0 %949
        %951 = vadd.xlane.f32.xlu0 %v907
        %v952 = vpop.xlane.xlu0 %951
        %953 = vadd.xlane.f32.xlu0 %v908
        %v954 = vpop.xlane.xlu0 %953
        %955 = vadd.xlane.f32.xlu0 %v909
        %v956 = vpop.xlane.xlu0 %955
        %957 = vadd.xlane.f32.xlu0 %v910
        %v958 = vpop.xlane.xlu0 %957
        %959 = vadd.xlane.f32.xlu0 %v911
        %v960 = vpop.xlane.xlu0 %959
        %961 = vadd.xlane.f32.xlu0 %v912
        %v962 = vpop.xlane.xlu0 %961
        %963 = vadd.xlane.f32.xlu0 %v913
        %v964 = vpop.xlane.xlu0 %963
        %965 = vadd.xlane.f32.xlu0 %v914
        %v966 = vpop.xlane.xlu0 %965
        %967 = vadd.xlane.f32.xlu0 %v915
        %v968 = vpop.xlane.xlu0 %967
        %969 = vadd.xlane.f32.xlu0 %v916
        %v970 = vpop.xlane.xlu0 %969
        %971 = vadd.xlane.f32.xlu0 %v917
        %v972 = vpop.xlane.xlu0 %971
        %973 = vadd.xlane.f32.xlu0 %v918
        %v974 = vpop.xlane.xlu0 %973
        %975 = vadd.xlane.f32.xlu0 %v919
        %v976 = vpop.xlane.xlu0 %975
        %977 = vadd.xlane.f32.xlu0 %v920
        %v978 = vpop.xlane.xlu0 %977
        %979 = vadd.xlane.f32.xlu0 %v921
        %v980 = vpop.xlane.xlu0 %979
        %981 = vadd.xlane.f32.xlu0 %v922
        %v982 = vpop.xlane.xlu0 %981
        %983 = vadd.xlane.f32.xlu0 %v923
        %v984 = vpop.xlane.xlu0 %983
        %985 = vadd.xlane.f32.xlu0 %v924
        %v986 = vpop.xlane.xlu0 %985
        %987 = vadd.xlane.f32.xlu0 %v925
        %v988 = vpop.xlane.xlu0 %987
        %989 = vadd.xlane.f32.xlu0 %v926
        %v990 = vpop.xlane.xlu0 %989
        %v991 = vmul.f32 %v928, 0.0078125
        %v992 = vmul.f32 %v930, 0.0078125
        %v993 = vmul.f32 %v932, 0.0078125
        %v994 = vmul.f32 %v934, 0.0078125
        %v995 = vmul.f32 %v936, 0.0078125
        %v996 = vmul.f32 %v938, 0.0078125
        %v997 = vmul.f32 %v940, 0.0078125
        %v998 = vmul.f32 %v942, 0.0078125
        %v999 = vmul.f32 %v944, 0.0078125
        %v1000 = vmul.f32 %v946, 0.0078125
        %v1001 = vmul.f32 %v948, 0.0078125
        %v1002 = vmul.f32 %v950, 0.0078125
        %v1003 = vmul.f32 %v952, 0.0078125
        %v1004 = vmul.f32 %v954, 0.0078125
        %v1005 = vmul.f32 %v956, 0.0078125
        %v1006 = vmul.f32 %v958, 0.0078125
        %v1007 = vmul.f32 %v960, 0.0078125
        %v1008 = vmul.f32 %v962, 0.0078125
        %v1009 = vmul.f32 %v964, 0.0078125
        %v1010 = vmul.f32 %v966, 0.0078125
        %v1011 = vmul.f32 %v968, 0.0078125
        %v1012 = vmul.f32 %v970, 0.0078125
        %v1013 = vmul.f32 %v972, 0.0078125
        %v1014 = vmul.f32 %v974, 0.0078125
        %v1015 = vmul.f32 %v976, 0.0078125
        %v1016 = vmul.f32 %v978, 0.0078125
        %v1017 = vmul.f32 %v980, 0.0078125
        %v1018 = vmul.f32 %v982, 0.0078125
        %v1019 = vmul.f32 %v984, 0.0078125
        %v1020 = vmul.f32 %v986, 0.0078125
        %v1021 = vmul.f32 %v988, 0.0078125
        %v1022 = vmul.f32 %v990, 0.0078125
        %v1023 = vsub.f32 %v895, %v991
        %v1024 = vsub.f32 %v896, %v992
        %v1025 = vsub.f32 %v897, %v993
        %v1026 = vsub.f32 %v898, %v994
        %v1027 = vsub.f32 %v899, %v995
        %v1028 = vsub.f32 %v900, %v996
        %v1029 = vsub.f32 %v901, %v997
        %v1030 = vsub.f32 %v902, %v998
        %v1031 = vsub.f32 %v903, %v999
        %v1032 = vsub.f32 %v904, %v1000
        %v1033 = vsub.f32 %v905, %v1001
        %v1034 = vsub.f32 %v906, %v1002
        %v1035 = vsub.f32 %v907, %v1003
        %v1036 = vsub.f32 %v908, %v1004
        %v1037 = vsub.f32 %v909, %v1005
        %v1038 = vsub.f32 %v910, %v1006
        %v1039 = vsub.f32 %v911, %v1007
        %v1040 = vsub.f32 %v912, %v1008
        %v1041 = vsub.f32 %v913, %v1009
        %v1042 = vsub.f32 %v914, %v1010
        %v1043 = vsub.f32 %v915, %v1011
        %v1044 = vsub.f32 %v916, %v1012
        %v1045 = vsub.f32 %v917, %v1013
        %v1046 = vsub.f32 %v918, %v1014
        %v1047 = vsub.f32 %v919, %v1015
        %v1048 = vsub.f32 %v920, %v1016
        %v1049 = vsub.f32 %v921, %v1017
        %v1050 = vsub.f32 %v922, %v1018
        %v1051 = vsub.f32 %v923, %v1019
        %v1052 = vsub.f32 %v924, %v1020
        %v1053 = vsub.f32 %v925, %v1021
        %v1054 = vsub.f32 %v926, %v1022
        %v1055 = vmul.f32 %v1023, %v1023
        %v1056 = vmul.f32 %v1024, %v1024
        %v1057 = vmul.f32 %v1025, %v1025
        %v1058 = vmul.f32 %v1026, %v1026
        %v1059 = vmul.f32 %v1027, %v1027
        %v1060 = vmul.f32 %v1028, %v1028
        %v1061 = vmul.f32 %v1029, %v1029
        %v1062 = vmul.f32 %v1030, %v1030
        %v1063 = vmul.f32 %v1031, %v1031
        %v1064 = vmul.f32 %v1032, %v1032
        %v1065 = vmul.f32 %v1033, %v1033
        %v1066 = vmul.f32 %v1034, %v1034
        %v1067 = vmul.f32 %v1035, %v1035
        %v1068 = vmul.f32 %v1036, %v1036
        %v1069 = vmul.f32 %v1037, %v1037
        %v1070 = vmul.f32 %v1038, %v1038
        %v1071 = vmul.f32 %v1039, %v1039
        %v1072 = vmul.f32 %v1040, %v1040
        %v1073 = vmul.f32 %v1041, %v1041
        %v1074 = vmul.f32 %v1042, %v1042
        %v1075 = vmul.f32 %v1043, %v1043
        %v1076 = vmul.f32 %v1044, %v1044
        %v1077 = vmul.f32 %v1045, %v1045
        %v1078 = vmul.f32 %v1046, %v1046
        %v1079 = vmul.f32 %v1047, %v1047
        %v1080 = vmul.f32 %v1048, %v1048
        %v1081 = vmul.f32 %v1049, %v1049
        %v1082 = vmul.f32 %v1050, %v1050
        %v1083 = vmul.f32 %v1051, %v1051
        %v1084 = vmul.f32 %v1052, %v1052
        %v1085 = vmul.f32 %v1053, %v1053
        %v1086 = vmul.f32 %v1054, %v1054
        %1087 = vadd.xlane.f32.xlu0 %v1055
        %v1088 = vpop.xlane.xlu0 %1087
        %1089 = vadd.xlane.f32.xlu0 %v1056
        %v1090 = vpop.xlane.xlu0 %1089
        %1091 = vadd.xlane.f32.xlu0 %v1057
        %v1092 = vpop.xlane.xlu0 %1091
        %1093 = vadd.xlane.f32.xlu0 %v1058
        %v1094 = vpop.xlane.xlu0 %1093
        %1095 = vadd.xlane.f32.xlu0 %v1059
        %v1096 = vpop.xlane.xlu0 %1095
        %1097 = vadd.xlane.f32.xlu0 %v1060
        %v1098 = vpop.xlane.xlu0 %1097
        %1099 = vadd.xlane.f32.xlu0 %v1061
        %v1100 = vpop.xlane.xlu0 %1099
        %1101 = vadd.xlane.f32.xlu0 %v1062
        %v1102 = vpop.xlane.xlu0 %1101
        %1103 = vadd.xlane.f32.xlu0 %v1063
        %v1104 = vpop.xlane.xlu0 %1103
        %1105 = vadd.xlane.f32.xlu0 %v1064
        %v1106 = vpop.xlane.xlu0 %1105
        %1107 = vadd.xlane.f32.xlu0 %v1065
        %v1108 = vpop.xlane.xlu0 %1107
        %1109 = vadd.xlane.f32.xlu0 %v1066
        %v1110 = vpop.xlane.xlu0 %1109
        %1111 = vadd.xlane.f32.xlu0 %v1067
        %v1112 = vpop.xlane.xlu0 %1111
        %1113 = vadd.xlane.f32.xlu0 %v1068
        %v1114 = vpop.xlane.xlu0 %1113
        %1115 = vadd.xlane.f32.xlu0 %v1069
        %v1116 = vpop.xlane.xlu0 %1115
        %1117 = vadd.xlane.f32.xlu0 %v1070
        %v1118 = vpop.xlane.xlu0 %1117
        %1119 = vadd.xlane.f32.xlu0 %v1071
        %v1120 = vpop.xlane.xlu0 %1119
        %1121 = vadd.xlane.f32.xlu0 %v1072
        %v1122 = vpop.xlane.xlu0 %1121
        %1123 = vadd.xlane.f32.xlu0 %v1073
        %v1124 = vpop.xlane.xlu0 %1123
        %1125 = vadd.xlane.f32.xlu0 %v1074
        %v1126 = vpop.xlane.xlu0 %1125
        %1127 = vadd.xlane.f32.xlu0 %v1075
        %v1128 = vpop.xlane.xlu0 %1127
        %1129 = vadd.xlane.f32.xlu0 %v1076
        %v1130 = vpop.xlane.xlu0 %1129
        %1131 = vadd.xlane.f32.xlu0 %v1077
        %v1132 = vpop.xlane.xlu0 %1131
        %1133 = vadd.xlane.f32.xlu0 %v1078
        %v1134 = vpop.xlane.xlu0 %1133
        %1135 = vadd.xlane.f32.xlu0 %v1079
        %v1136 = vpop.xlane.xlu0 %1135
        %1137 = vadd.xlane.f32.xlu0 %v1080
        %v1138 = vpop.xlane.xlu0 %1137
        %1139 = vadd.xlane.f32.xlu0 %v1081
        %v1140 = vpop.xlane.xlu0 %1139
        %1141 = vadd.xlane.f32.xlu0 %v1082
        %v1142 = vpop.xlane.xlu0 %1141
        %1143 = vadd.xlane.f32.xlu0 %v1083
        %v1144 = vpop.xlane.xlu0 %1143
        %1145 = vadd.xlane.f32.xlu0 %v1084
        %v1146 = vpop.xlane.xlu0 %1145
        %1147 = vadd.xlane.f32.xlu0 %v1085
        %v1148 = vpop.xlane.xlu0 %1147
        %1149 = vadd.xlane.f32.xlu0 %v1086
        %v1150 = vpop.xlane.xlu0 %1149
        %v1151 = vmul.f32 %v1088, 0.0078125
        %v1152 = vmul.f32 %v1090, 0.0078125
        %v1153 = vmul.f32 %v1092, 0.0078125
        %v1154 = vmul.f32 %v1094, 0.0078125
        %v1155 = vmul.f32 %v1096, 0.0078125
        %v1156 = vmul.f32 %v1098, 0.0078125
        %v1157 = vmul.f32 %v1100, 0.0078125
        %v1158 = vmul.f32 %v1102, 0.0078125
        %v1159 = vmul.f32 %v1104, 0.0078125
        %v1160 = vmul.f32 %v1106, 0.0078125
        %v1161 = vmul.f32 %v1108, 0.0078125
        %v1162 = vmul.f32 %v1110, 0.0078125
        %v1163 = vmul.f32 %v1112, 0.0078125
        %v1164 = vmul.f32 %v1114, 0.0078125
        %v1165 = vmul.f32 %v1116, 0.0078125
        %v1166 = vmul.f32 %v1118, 0.0078125
        %v1167 = vmul.f32 %v1120, 0.0078125
        %v1168 = vmul.f32 %v1122, 0.0078125
        %v1169 = vmul.f32 %v1124, 0.0078125
        %v1170 = vmul.f32 %v1126, 0.0078125
        %v1171 = vmul.f32 %v1128, 0.0078125
        %v1172 = vmul.f32 %v1130, 0.0078125
        %v1173 = vmul.f32 %v1132, 0.0078125
        %v1174 = vmul.f32 %v1134, 0.0078125
        %v1175 = vmul.f32 %v1136, 0.0078125
        %v1176 = vmul.f32 %v1138, 0.0078125
        %v1177 = vmul.f32 %v1140, 0.0078125
        %v1178 = vmul.f32 %v1142, 0.0078125
        %v1179 = vmul.f32 %v1144, 0.0078125
        %v1180 = vmul.f32 %v1146, 0.0078125
        %v1181 = vmul.f32 %v1148, 0.0078125
        %v1182 = vmul.f32 %v1150, 0.0078125
        %v1183 = vadd.f32 %v1151, 1e-05
        %v1184 = vadd.f32 %v1152, 1e-05
        %v1185 = vadd.f32 %v1153, 1e-05
        %v1186 = vadd.f32 %v1154, 1e-05
        %v1187 = vadd.f32 %v1155, 1e-05
        %v1188 = vadd.f32 %v1156, 1e-05
        %v1189 = vadd.f32 %v1157, 1e-05
        %v1190 = vadd.f32 %v1158, 1e-05
        %v1191 = vadd.f32 %v1159, 1e-05
        %v1192 = vadd.f32 %v1160, 1e-05
        %v1193 = vadd.f32 %v1161, 1e-05
        %v1194 = vadd.f32 %v1162, 1e-05
        %v1195 = vadd.f32 %v1163, 1e-05
        %v1196 = vadd.f32 %v1164, 1e-05
        %v1197 = vadd.f32 %v1165, 1e-05
        %v1198 = vadd.f32 %v1166, 1e-05
        %v1199 = vadd.f32 %v1167, 1e-05
        %v1200 = vadd.f32 %v1168, 1e-05
        %v1201 = vadd.f32 %v1169, 1e-05
        %v1202 = vadd.f32 %v1170, 1e-05
        %v1203 = vadd.f32 %v1171, 1e-05
        %v1204 = vadd.f32 %v1172, 1e-05
        %v1205 = vadd.f32 %v1173, 1e-05
        %v1206 = vadd.f32 %v1174, 1e-05
        %v1207 = vadd.f32 %v1175, 1e-05
        %v1208 = vadd.f32 %v1176, 1e-05
        %v1209 = vadd.f32 %v1177, 1e-05
        %v1210 = vadd.f32 %v1178, 1e-05
        %v1211 = vadd.f32 %v1179, 1e-05
        %v1212 = vadd.f32 %v1180, 1e-05
        %v1213 = vadd.f32 %v1181, 1e-05
        %v1214 = vadd.f32 %v1182, 1e-05
        %v1215 = vrsqrt.pop %v1183
        %v1216 = vrsqrt.pop %v1184
        %v1217 = vrsqrt.pop %v1185
        %v1218 = vrsqrt.pop %v1186
        %v1219 = vrsqrt.pop %v1187
        %v1220 = vrsqrt.pop %v1188
        %v1221 = vrsqrt.pop %v1189
        %v1222 = vrsqrt.pop %v1190
        %v1223 = vrsqrt.pop %v1191
        %v1224 = vrsqrt.pop %v1192
        %v1225 = vrsqrt.pop %v1193
        %v1226 = vrsqrt.pop %v1194
        %v1227 = vrsqrt.pop %v1195
        %v1228 = vrsqrt.pop %v1196
        %v1229 = vrsqrt.pop %v1197
        %v1230 = vrsqrt.pop %v1198
        %v1231 = vrsqrt.pop %v1199
        %v1232 = vrsqrt.pop %v1200
        %v1233 = vrsqrt.pop %v1201
        %v1234 = vrsqrt.pop %v1202
        %v1235 = vrsqrt.pop %v1203
        %v1236 = vrsqrt.pop %v1204
        %v1237 = vrsqrt.pop %v1205
        %v1238 = vrsqrt.pop %v1206
        %v1239 = vrsqrt.pop %v1207
        %v1240 = vrsqrt.pop %v1208
        %v1241 = vrsqrt.pop %v1209
        %v1242 = vrsqrt.pop %v1210
        %v1243 = vrsqrt.pop %v1211
        %v1244 = vrsqrt.pop %v1212
        %v1245 = vrsqrt.pop %v1213
        %v1246 = vrsqrt.pop %v1214
        %v1247 = vmul.f32 %v1023, %v1215
        %v1248 = vmul.f32 %v1024, %v1216
        %v1249 = vmul.f32 %v1025, %v1217
        %v1250 = vmul.f32 %v1026, %v1218
        %v1251 = vmul.f32 %v1027, %v1219
        %v1252 = vmul.f32 %v1028, %v1220
        %v1253 = vmul.f32 %v1029, %v1221
        %v1254 = vmul.f32 %v1030, %v1222
        %v1255 = vmul.f32 %v1031, %v1223
        %v1256 = vmul.f32 %v1032, %v1224
        %v1257 = vmul.f32 %v1033, %v1225
        %v1258 = vmul.f32 %v1034, %v1226
        %v1259 = vmul.f32 %v1035, %v1227
        %v1260 = vmul.f32 %v1036, %v1228
        %v1261 = vmul.f32 %v1037, %v1229
        %v1262 = vmul.f32 %v1038, %v1230
        %v1263 = vmul.f32 %v1039, %v1231
        %v1264 = vmul.f32 %v1040, %v1232
        %v1265 = vmul.f32 %v1041, %v1233
        %v1266 = vmul.f32 %v1042, %v1234
        %v1267 = vmul.f32 %v1043, %v1235
        %v1268 = vmul.f32 %v1044, %v1236
        %v1269 = vmul.f32 %v1045, %v1237
        %v1270 = vmul.f32 %v1046, %v1238
        %v1271 = vmul.f32 %v1047, %v1239
        %v1272 = vmul.f32 %v1048, %v1240
        %v1273 = vmul.f32 %v1049, %v1241
        %v1274 = vmul.f32 %v1050, %v1242
        %v1275 = vmul.f32 %v1051, %v1243
        %v1276 = vmul.f32 %v1052, %v1244
        %v1277 = vmul.f32 %v1053, %v1245
        %v1278 = vmul.f32 %v1054, %v1246
        %v1279 = vld [vmem:[%s3] sm:$0x1]
        %v1281 = vlaneseq
        %v1282 = vshrl.u32 %v1281, 7
        %v1283 = vsub.s32 0, %v1282
        %v1284 = vrot.slane %v1279, %v1283
        %v1286 = vmul.f32 %v1247, %v1284
        %v1287 = vmul.f32 %v1248, %v1284
        %v1288 = vmul.f32 %v1249, %v1284
        %v1289 = vmul.f32 %v1250, %v1284
        %v1290 = vmul.f32 %v1251, %v1284
        %v1291 = vmul.f32 %v1252, %v1284
        %v1292 = vmul.f32 %v1253, %v1284
        %v1293 = vmul.f32 %v1254, %v1284
        %v1294 = vmul.f32 %v1255, %v1284
        %v1295 = vmul.f32 %v1256, %v1284
        %v1296 = vmul.f32 %v1257, %v1284
        %v1297 = vmul.f32 %v1258, %v1284
        %v1298 = vmul.f32 %v1259, %v1284
        %v1299 = vmul.f32 %v1260, %v1284
        %v1300 = vmul.f32 %v1261, %v1284
        %v1301 = vmul.f32 %v1262, %v1284
        %v1302 = vmul.f32 %v1263, %v1284
        %v1303 = vmul.f32 %v1264, %v1284
        %v1304 = vmul.f32 %v1265, %v1284
        %v1305 = vmul.f32 %v1266, %v1284
        %v1306 = vmul.f32 %v1267, %v1284
        %v1307 = vmul.f32 %v1268, %v1284
        %v1308 = vmul.f32 %v1269, %v1284
        %v1309 = vmul.f32 %v1270, %v1284
        %v1310 = vmul.f32 %v1271, %v1284
        %v1311 = vmul.f32 %v1272, %v1284
        %v1312 = vmul.f32 %v1273, %v1284
        %v1313 = vmul.f32 %v1274, %v1284
        %v1314 = vmul.f32 %v1275, %v1284
        %v1315 = vmul.f32 %v1276, %v1284
        %v1316 = vmul.f32 %v1277, %v1284
        %v1317 = vmul.f32 %v1278, %v1284
        %v1318 = vld [vmem:[%s4] sm:$0x1]
        %v1320 = vlaneseq
        %v1321 = vshrl.u32 %v1320, 7
        %v1322 = vsub.s32 0, %v1321
        %v1323 = vrot.slane %v1318, %v1322
        %v1325 = vadd.f32 %v1286, %v1323
        %v1326 = vadd.f32 %v1287, %v1323
        %v1327 = vadd.f32 %v1288, %v1323
        %v1328 = vadd.f32 %v1289, %v1323
        %v1329 = vadd.f32 %v1290, %v1323
        %v1330 = vadd.f32 %v1291, %v1323
        %v1331 = vadd.f32 %v1292, %v1323
        %v1332 = vadd.f32 %v1293, %v1323
        %v1333 = vadd.f32 %v1294, %v1323
        %v1334 = vadd.f32 %v1295, %v1323
        %v1335 = vadd.f32 %v1296, %v1323
        %v1336 = vadd.f32 %v1297, %v1323
        %v1337 = vadd.f32 %v1298, %v1323
        %v1338 = vadd.f32 %v1299, %v1323
        %v1339 = vadd.f32 %v1300, %v1323
        %v1340 = vadd.f32 %v1301, %v1323
        %v1341 = vadd.f32 %v1302, %v1323
        %v1342 = vadd.f32 %v1303, %v1323
        %v1343 = vadd.f32 %v1304, %v1323
        %v1344 = vadd.f32 %v1305, %v1323
        %v1345 = vadd.f32 %v1306, %v1323
        %v1346 = vadd.f32 %v1307, %v1323
        %v1347 = vadd.f32 %v1308, %v1323
        %v1348 = vadd.f32 %v1309, %v1323
        %v1349 = vadd.f32 %v1310, %v1323
        %v1350 = vadd.f32 %v1311, %v1323
        %v1351 = vadd.f32 %v1312, %v1323
        %v1352 = vadd.f32 %v1313, %v1323
        %v1353 = vadd.f32 %v1314, %v1323
        %v1354 = vadd.f32 %v1315, %v1323
        %v1355 = vadd.f32 %v1316, %v1323
        %v1356 = vadd.f32 %v1317, %v1323
        %v1357 = vmax.f32 %v1325, 0.0
        %v1358 = vmax.f32 %v1326, 0.0
        %v1359 = vmax.f32 %v1327, 0.0
        %v1360 = vmax.f32 %v1328, 0.0
        %v1361 = vmax.f32 %v1329, 0.0
        %v1362 = vmax.f32 %v1330, 0.0
        %v1363 = vmax.f32 %v1331, 0.0
        %v1364 = vmax.f32 %v1332, 0.0
        %v1365 = vmax.f32 %v1333, 0.0
        %v1366 = vmax.f32 %v1334, 0.0
        %v1367 = vmax.f32 %v1335, 0.0
        %v1368 = vmax.f32 %v1336, 0.0
        %v1369 = vmax.f32 %v1337, 0.0
        %v1370 = vmax.f32 %v1338, 0.0
        %v1371 = vmax.f32 %v1339, 0.0
        %v1372 = vmax.f32 %v1340, 0.0
        %v1373 = vmax.f32 %v1341, 0.0
        %v1374 = vmax.f32 %v1342, 0.0
        %v1375 = vmax.f32 %v1343, 0.0
        %v1376 = vmax.f32 %v1344, 0.0
        %v1377 = vmax.f32 %v1345, 0.0
        %v1378 = vmax.f32 %v1346, 0.0
        %v1379 = vmax.f32 %v1347, 0.0
        %v1380 = vmax.f32 %v1348, 0.0
        %v1381 = vmax.f32 %v1349, 0.0
        %v1382 = vmax.f32 %v1350, 0.0
        %v1383 = vmax.f32 %v1351, 0.0
        %v1384 = vmax.f32 %v1352, 0.0
        %v1385 = vmax.f32 %v1353, 0.0
        %v1386 = vmax.f32 %v1354, 0.0
        %v1387 = vmax.f32 %v1355, 0.0
        %v1388 = vmax.f32 %v1356, 0.0
        %v1389 = vadd.f32 %v1357, %v260
        %v1390 = vadd.f32 %v1358, %v261
        %v1391 = vadd.f32 %v1359, %v262
        %v1392 = vadd.f32 %v1360, %v263
        %v1393 = vadd.f32 %v1361, %v264
        %v1394 = vadd.f32 %v1362, %v265
        %v1395 = vadd.f32 %v1363, %v266
        %v1396 = vadd.f32 %v1364, %v267
        %v1397 = vadd.f32 %v1365, %v268
        %v1398 = vadd.f32 %v1366, %v269
        %v1399 = vadd.f32 %v1367, %v270
        %v1400 = vadd.f32 %v1368, %v271
        %v1401 = vadd.f32 %v1369, %v272
        %v1402 = vadd.f32 %v1370, %v273
        %v1403 = vadd.f32 %v1371, %v274
        %v1404 = vadd.f32 %v1372, %v275
        %v1405 = vadd.f32 %v1373, %v276
        %v1406 = vadd.f32 %v1374, %v277
        %v1407 = vadd.f32 %v1375, %v278
        %v1408 = vadd.f32 %v1376, %v279
        %v1409 = vadd.f32 %v1377, %v280
        %v1410 = vadd.f32 %v1378, %v281
        %v1411 = vadd.f32 %v1379, %v282
        %v1412 = vadd.f32 %v1380, %v283
        %v1413 = vadd.f32 %v1381, %v284
        %v1414 = vadd.f32 %v1382, %v285
        %v1415 = vadd.f32 %v1383, %v286
        %v1416 = vadd.f32 %v1384, %v287
        %v1417 = vadd.f32 %v1385, %v288
        %v1418 = vadd.f32 %v1386, %v289
        %v1419 = vadd.f32 %v1387, %v290
        %v1420 = vadd.f32 %v1388, %v291
        %v1421 = vmax.f32 %v1389, 0.0
        %v1422 = vmax.f32 %v1390, 0.0
        %v1423 = vmax.f32 %v1391, 0.0
        %v1424 = vmax.f32 %v1392, 0.0
        %v1425 = vmax.f32 %v1393, 0.0
        %v1426 = vmax.f32 %v1394, 0.0
        %v1427 = vmax.f32 %v1395, 0.0
        %v1428 = vmax.f32 %v1396, 0.0
        %v1429 = vmax.f32 %v1397, 0.0
        %v1430 = vmax.f32 %v1398, 0.0
        %v1431 = vmax.f32 %v1399, 0.0
        %v1432 = vmax.f32 %v1400, 0.0
        %v1433 = vmax.f32 %v1401, 0.0
        %v1434 = vmax.f32 %v1402, 0.0
        %v1435 = vmax.f32 %v1403, 0.0
        %v1436 = vmax.f32 %v1404, 0.0
        %v1437 = vmax.f32 %v1405, 0.0
        %v1438 = vmax.f32 %v1406, 0.0
        %v1439 = vmax.f32 %v1407, 0.0
        %v1440 = vmax.f32 %v1408, 0.0
        %v1441 = vmax.f32 %v1409, 0.0
        %v1442 = vmax.f32 %v1410, 0.0
        %v1443 = vmax.f32 %v1411, 0.0
        %v1444 = vmax.f32 %v1412, 0.0
        %v1445 = vmax.f32 %v1413, 0.0
        %v1446 = vmax.f32 %v1414, 0.0
        %v1447 = vmax.f32 %v1415, 0.0
        %v1448 = vmax.f32 %v1416, 0.0
        %v1449 = vmax.f32 %v1417, 0.0
        %v1450 = vmax.f32 %v1418, 0.0
        %v1451 = vmax.f32 %v1419, 0.0
        %v1452 = vmax.f32 %v1420, 0.0
        %1453 = vst [vmem:[%s257] sm:$0xff] %v1421
        %1454 = vst [vmem:[%s257 + $0x8] sm:$0xff] %v1422
        %1455 = vst [vmem:[%s257 + $0x10] sm:$0xff] %v1423
        %1456 = vst [vmem:[%s257 + $0x18] sm:$0xff] %v1424
        %1457 = vst [vmem:[%s257 + $0x20] sm:$0xff] %v1425
        %1458 = vst [vmem:[%s257 + $0x28] sm:$0xff] %v1426
        %1459 = vst [vmem:[%s257 + $0x30] sm:$0xff] %v1427
        %1460 = vst [vmem:[%s257 + $0x38] sm:$0xff] %v1428
        %1461 = vst [vmem:[%s257 + $0x40] sm:$0xff] %v1429
        %1462 = vst [vmem:[%s257 + $0x48] sm:$0xff] %v1430
        %1463 = vst [vmem:[%s257 + $0x50] sm:$0xff] %v1431
        %1464 = vst [vmem:[%s257 + $0x58] sm:$0xff] %v1432
        %1465 = vst [vmem:[%s257 + $0x60] sm:$0xff] %v1433
        %1466 = vst [vmem:[%s257 + $0x68] sm:$0xff] %v1434
        %1467 = vst [vmem:[%s257 + $0x70] sm:$0xff] %v1435
        %1468 = vst [vmem:[%s257 + $0x78] sm:$0xff] %v1436
        %1469 = vst [vmem:[%s257 + $0x80] sm:$0xff] %v1437
        %1470 = vst [vmem:[%s257 + $0x88] sm:$0xff] %v1438
        %1471 = vst [vmem:[%s257 + $0x90] sm:$0xff] %v1439
        %1472 = vst [vmem:[%s257 + $0x98] sm:$0xff] %v1440
        %1473 = vst [vmem:[%s257 + $0xa0] sm:$0xff] %v1441
        %1474 = vst [vmem:[%s257 + $0xa8] sm:$0xff] %v1442
        %1475 = vst [vmem:[%s257 + $0xb0] sm:$0xff] %v1443
        %1476 = vst [vmem:[%s257 + $0xb8] sm:$0xff] %v1444
        %1477 = vst [vmem:[%s257 + $0xc0] sm:$0xff] %v1445
        %1478 = vst [vmem:[%s257 + $0xc8] sm:$0xff] %v1446
        %1479 = vst [vmem:[%s257 + $0xd0] sm:$0xff] %v1447
        %1480 = vst [vmem:[%s257 + $0xd8] sm:$0xff] %v1448
        %1481 = vst [vmem:[%s257 + $0xe0] sm:$0xff] %v1449
        %1482 = vst [vmem:[%s257 + $0xe8] sm:$0xff] %v1450
        %1483 = vst [vmem:[%s257 + $0xf0] sm:$0xff] %v1451
        %1484 = vst [vmem:[%s257 + $0xf8] sm:$0xff] %v1452
        %s1485 = sand.u32 %s141, 1
        %s1486 = scalar_lea.sflag [#allocation4], %s1485
        %s1487 = sand.u32 %s141, 1
        %s1488 = smul.addr %s1487, 256
        %s1489 = scalar_lea.vmem [#allocation7], %s1488
        // Predicated region
        $region49: #{tpu_custom_call.1} parent=39 // pred_check
          %p1490 = pneg %p151
        $region50: #{tpu_custom_call.1} parent=39 // pred_check_branch
          %1492 = sbr.rel (%p1490) target = $region52
        $region51: #{tpu_custom_call.1} parent=39 // pred_region
          %s1493 = smul.u32 32, %s23
          %s1495 = ssub.s32 4096, 4096
          %1496 = vsyncadd %s1486, %s1495
          %s1497 = smul.addr %s1493, 128
          %s1498 = scalar_lea.hbm %s5, %s1497
          %s1499 = sshll.u32 %s1489, 4
          %s1500 = int_to_ptr.vmem [resolvable:$true] %s1499
          %1505 = dma.vmem_to_hbm [thread:$0]  %s1500, 4096, %s1498, %s1486, 128, 128, 8
        $region52: #{tpu_custom_call.1} parent=39 // pred_fallthru
          _
      $region40: #{tpu_custom_call.1} parent=5 // pred_fallthru
        _
      %p1506 = scmp.le.s32.totalorder 2, %s18
      // Predicated region
      $region53: #{tpu_custom_call.1} parent=5 // pred_check
        %p1507 = pneg %p1506
      $region54: #{tpu_custom_call.1} parent=5 // pred_check_branch
        %1509 = sbr.rel (%p1507) target = $region56
      $region55: #{tpu_custom_call.1} parent=5 // pred_region
        %s1510 = ssub.s32 %s18, 2
        // Predicated region
        $region57: #{tpu_custom_call.1} parent=55 // pred_check
          %p1511 = pneg %p157
        $region58: #{tpu_custom_call.1} parent=55 // pred_check_branch
          %1513 = sbr.rel (%p1511) target = $region60
        $region59: #{tpu_custom_call.1} parent=55 // pred_region
          %s1514 = sand.u32 %s142, 1
          %s1515 = scalar_lea.sflag [#allocation4], %s1514
          %s1516 = sand.u32 %s142, 1
          %s1517 = smul.addr %s1516, 256
          %s1518 = scalar_lea.vmem [#allocation7], %s1517
          %1519 = dma.done %s1515, 4096
        $region60: #{tpu_custom_call.1} parent=55 // pred_fallthru
          _
      $region56: #{tpu_custom_call.1} parent=5 // pred_fallthru
        _
    $region6: #{tpu_custom_call.1} parent=1 // loop_footer
      %s22 = sadd.s32 1, %s18
    $region7: #{tpu_custom_call.1} parent=1 // loop_footer_branch
      %17 = sbr.rel target = $region3
    $region8: #{tpu_custom_call.1} parent=1 // loop_exit
      _
    %1520 = vsyncpa [#allocation3], 1
    %s1521 = scalar_lea.sflag [#allocation3], 1
    %1522 = vsyncpa %s1521, 1
    %1523 = vsyncpa [#allocation6], 1
    %1524 = vsyncpa [#allocation4], 1
    %s1525 = scalar_lea.sflag [#allocation4], 1
    %1526 = vsyncpa %s1525, 1

</llo_original>
